<compile_context>
chip_gen: v5e
topology: v5e:2x2
jax: 0.10.0
libtpu: 0.0.40
codegen_flags: <defaults>
</compile_context>

<pallas_src>
import numpy as np

import jax
import jax.numpy as jnp
from jax.experimental import pallas as pl
from jax.experimental.pallas import tpu as pltpu


def _round_up(x, m):
    return (x + m - 1) // m * m


# ----------------------------------------------------------------------------
# Fused Pallas kernel:  logits = (relu(relu(x@M1+b1)@M2+b2)) @ Wh + bh
# All intermediates live in vregs/VMEM; only the lane-dense logits block is
# written back to HBM.
# ----------------------------------------------------------------------------
def _actor_fused_kernel(x_ref, m1_ref, b1_ref, m2_ref, b2_ref, wh_ref, bh_ref,
                        o_ref):
    # Conv1 (unrolled) + bias + ReLU.  Accumulate in f32 on the MXU.
    x = x_ref[...].astype(m1_ref.dtype)
    h1 = jnp.dot(x, m1_ref[...], preferred_element_type=jnp.float32)
    h1 = jnp.maximum(h1 + b1_ref[...], 0.0)                  # [TM, 784] f32

    # Conv2 (unrolled) + bias + ReLU.
    h2 = jnp.dot(h1.astype(m2_ref.dtype), m2_ref[...],
                 preferred_element_type=jnp.float32)
    h2 = jnp.maximum(h2 + b2_ref[...], 0.0)                  # [TM, 128] f32
    # h2 column order is (co, oh, ow)  ==  PyTorch flatten of [B,32,2,2].

    # Head (Linear).  Output is padded to 128 lanes (extra cols are zero).
    logits = jnp.dot(h2.astype(wh_ref.dtype), wh_ref[...],
                     preferred_element_type=jnp.float32) + bh_ref[...]
    o_ref[...] = logits.astype(o_ref.dtype)                  # [TM, 128]


# ----------------------------------------------------------------------------
# One-time parameter preparation (hoisted out of the hot path).
# Each PyTorch Conv2d is folded into a dense matrix M so that for NCHW-flat x:
#     (x_flat @ M)[b, co*OH*OW + oh*OW + ow] == Conv2d(x)[b, co, oh, ow]
# ----------------------------------------------------------------------------
def _unroll_conv(W, b, H, Wd, stride, dtype):
    """W: [Co, Ci, k, k], b: [Co]  ->  M: [Ci*H*Wd, Co*OH*OW], b_exp: [1, Co*OH*OW]."""
    Co, Ci, k, _ = W.shape
    OH = (H - k) // stride + 1
    OW = (Wd - k) // stride + 1
    Wnp = np.asarray(W, np.float32)
    M = np.zeros((Ci * H * Wd, Co * OH * OW), np.float32)
    ci_idx = np.arange(Ci)
    co_idx = np.arange(Co)
    for oh in range(OH):
        for ow in range(OW):
            cols = co_idx * (OH * OW) + oh * OW + ow              # [Co]
            for kh in range(k):
                for kw in range(k):
                    ih = oh * stride + kh
                    iw = ow * stride + kw
                    rows = ci_idx * (H * Wd) + ih * Wd + iw        # [Ci]
                    M[np.ix_(rows, cols)] = Wnp[:, :, kh, kw].T    # [Ci, Co]
    b_exp = np.repeat(np.asarray(b, np.float32), OH * OW)[None, :]
    return jnp.asarray(M, dtype), jnp.asarray(b_exp, jnp.float32), OH, OW


def prepare_actor_params(params, obs_shape=(4, 16, 16), act_dim=6,
                         weights_dtype=jnp.float32):
    """One-time prep: unrolled conv matrices, expanded biases, padded head."""
    C, H, W = obs_shape
    M1, b1e, OH1, OW1 = _unroll_conv(params["W1"], params["b1"], H, W, 2,
                                     weights_dtype)
    M2, b2e, OH2, OW2 = _unroll_conv(params["W2"], params["b2"], OH1, OW1, 2,
                                     weights_dtype)
    z_features = params["W2"].shape[0] * OH2 * OW2                # 32*2*2 = 128

    n_out = _round_up(max(act_dim, 128), 128)                     # lane-dense out
    Wh = np.asarray(params["Wh"], np.float32)                     # [A, z]
    Whp = np.zeros((z_features, n_out), np.float32)
    Whp[:, :act_dim] = Wh.T
    bhp = np.zeros((1, n_out), np.float32)
    bhp[0, :act_dim] = np.asarray(params["bh"], np.float32)

    return {
        "M1": M1, "b1": b1e,
        "M2": M2, "b2": b2e,
        "Wh": jnp.asarray(Whp, weights_dtype), "bh": jnp.asarray(bhp),
        "act_dim": act_dim,
        "in_features": C * H * W,
        "n_out": n_out,
    }


# ----------------------------------------------------------------------------
# Forward: one pallas_call, batch tiled along a "parallel" grid axis.
# ----------------------------------------------------------------------------
def actor_forward(prep, state):
    """state: [B, 4, 16, 16] NCHW -> action-distribution logits [B, act_dim]."""
    B = state.shape[0]
    in_f = prep["in_features"]
    n_out = prep["n_out"]

    # NCHW flatten (matches torch .flatten / x.view(B,-1)); pure layout op.
    xf = state.reshape(B, in_f).astype(jnp.float32)

    # Sublane-aligned row tile; scales to multi-tile / multi-core for big B.
    TM = 128 if B > 128 else _round_up(max(B, 8), 8)
    B_pad = _round_up(B, TM)
    if B_pad != B:
        xf = jnp.pad(xf, ((0, B_pad - B), (0, 0)))
    grid_m = B_pad // TM

    K1, N1 = prep["M1"].shape
    N2 = prep["M2"].shape[1]

    out = pl.pallas_call(
        _actor_fused_kernel,
        out_shape=jax.ShapeDtypeStruct((B_pad, n_out), jnp.float32),
        grid=(grid_m,),
        in_specs=[
            pl.BlockSpec((TM, K1), lambda i: (i, 0)),    # x rows (tiled)
            pl.BlockSpec((K1, N1), lambda i: (0, 0)),    # M1 (grid-invariant)
            pl.BlockSpec((1, N1), lambda i: (0, 0)),     # b1
            pl.BlockSpec((N1, N2), lambda i: (0, 0)),    # M2
            pl.BlockSpec((1, N2), lambda i: (0, 0)),     # b2
            pl.BlockSpec((N2, n_out), lambda i: (0, 0)), # Wh (padded to 128 lanes)
            pl.BlockSpec((1, n_out), lambda i: (0, 0)),  # bh
        ],
        out_specs=pl.BlockSpec((TM, n_out), lambda i: (i, 0)),
        compiler_params=pltpu.CompilerParams(
            dimension_semantics=("parallel",)),
    )(xf, prep["M1"], prep["b1"], prep["M2"], prep["b2"], prep["Wh"],
      prep["bh"])

    return out[:B, :prep["act_dim"]]


# ----------------------------------------------------------------------------
# Deterministic parameter init (PyTorch-layout weights)
# ----------------------------------------------------------------------------
def init_actor_params(key, in_ch=4, act_dim=6):
    ks = jax.random.split(key, 6)
    p = {}
    p["W1"] = jax.random.normal(ks[0], (16, in_ch, 4, 4), jnp.float32) * 0.1
    p["b1"] = jax.random.normal(ks[1], (16,), jnp.float32) * 0.01
    p["W2"] = jax.random.normal(ks[2], (32, 16, 4, 4), jnp.float32) * 0.1
    p["b2"] = jax.random.normal(ks[3], (32,), jnp.float32) * 0.01
    z_features = 32 * 2 * 2  # after two stride-2 convs on 16x16 -> 2x2 spatial
    p["Wh"] = jax.random.normal(ks[4], (act_dim, z_features), jnp.float32) * 0.1
    p["bh"] = jax.random.normal(ks[5], (act_dim,), jnp.float32) * 0.01
    return p


# ----------------------------------------------------------------------------
# Reference in plain JAX (correctness check against module semantics)
# ----------------------------------------------------------------------------
def actor_forward_ref(params, state):
    def conv(x, W, b, s):
        y = jax.lax.conv_general_dilated(
            x, W, window_strides=(s, s), padding="VALID",
            dimension_numbers=("NCHW", "OIHW", "NCHW"))
        return jax.nn.relu(y + b[None, :, None, None])
    h = conv(state, params["W1"], params["b1"], 2)
    h = conv(h, params["W2"], params["b2"], 2)
    feats = h.reshape(h.shape[0], -1)
    return feats @ params["Wh"].T + params["bh"]


if __name__ == "__main__":
    key = jax.random.PRNGKey(0)
    k_param, k_obs = jax.random.split(key)
    params = init_actor_params(k_param, in_ch=4, act_dim=6)
    prep = prepare_actor_params(params, obs_shape=(4, 16, 16), act_dim=6)
    state = jax.random.normal(k_obs, (2, 4, 16, 16), jnp.float32)  # NCHW obs

    fwd = jax.jit(lambda s: actor_forward(prep, s))
    logits = jax.block_until_ready(fwd(state))
    ref = jax.block_until_ready(actor_forward_ref(params, state))

    assert logits.shape == (2, 6), logits.shape
    max_err = float(jnp.max(jnp.abs(logits - ref)))
    assert jnp.allclose(logits, ref, atol=1e-3, rtol=1e-3), max_err
    print("KERNEL_OK")
</pallas_src>

<mosaic_0001>
module attributes {stable_mosaic.version = 11 : i64} {
  func.func @_actor_fused_kernel(%arg0: i32, %arg1: memref<8x1024xf32, #tpu.memory_space<vmem>>, %arg2: memref<1024x784xf32, #tpu.memory_space<vmem>>, %arg3: memref<1x784xf32, #tpu.memory_space<vmem>>, %arg4: memref<784x128xf32, #tpu.memory_space<vmem>>, %arg5: memref<1x128xf32, #tpu.memory_space<vmem>>, %arg6: memref<128x128xf32, #tpu.memory_space<vmem>>, %arg7: memref<1x128xf32, #tpu.memory_space<vmem>>, %arg8: memref<8x128xf32, #tpu.memory_space<vmem>>) attributes {dimension_semantics = [#tpu.dimension_semantics<parallel>], iteration_bounds = array<i64: 1>, scalar_prefetch = 0 : i64, scratch_operands = 0 : i64, tpu.core_type = #tpu.core_type<tc>, window_params = [{transform_indices = @transform_0, window_bounds = array<i64: 8, 1024>}, {pipeline_mode = #tpu.pipeline_mode<synchronous>, transform_indices = @transform_1, window_bounds = array<i64: 1024, 784>}, {pipeline_mode = #tpu.pipeline_mode<synchronous>, transform_indices = @transform_2, window_bounds = array<i64: 1, 784>}, {pipeline_mode = #tpu.pipeline_mode<synchronous>, transform_indices = @transform_3, window_bounds = array<i64: 784, 128>}, {pipeline_mode = #tpu.pipeline_mode<synchronous>, transform_indices = @transform_4, window_bounds = array<i64: 1, 128>}, {pipeline_mode = #tpu.pipeline_mode<synchronous>, transform_indices = @transform_5, window_bounds = array<i64: 128, 128>}, {pipeline_mode = #tpu.pipeline_mode<synchronous>, transform_indices = @transform_6, window_bounds = array<i64: 1, 128>}, {transform_indices = @transform_7, window_bounds = array<i64: 8, 128>}]} {
    %c0 = arith.constant 0 : index
    %c0_0 = arith.constant 0 : index
    %0 = vector.load %arg1[%c0, %c0_0] : memref<8x1024xf32, #tpu.memory_space<vmem>>, vector<8x1024xf32>
    %c0_1 = arith.constant 0 : index
    %c0_2 = arith.constant 0 : index
    %1 = vector.load %arg2[%c0_1, %c0_2] : memref<1024x784xf32, #tpu.memory_space<vmem>>, vector<1024x784xf32>
    %cst = arith.constant dense<0.000000e+00> : vector<8x784xf32>
    %2 = tpu.matmul %0, %1, %cst {dimension_numbers = #tpu.dot_dimension_numbers<[1], [0], [0], [1], [0, 0, 1, 1], [], []>} : vector<8x1024xf32>, vector<1024x784xf32>, vector<8x784xf32> -> vector<8x784xf32>
    %c0_3 = arith.constant 0 : index
    %c0_4 = arith.constant 0 : index
    %3 = vector.load %arg3[%c0_3, %c0_4] : memref<1x784xf32, #tpu.memory_space<vmem>>, vector<1x784xf32>
    %4 = vector.broadcast %3 : vector<1x784xf32> to vector<8x784xf32>
    %5 = arith.addf %2, %4 : vector<8x784xf32>
    %cst_5 = arith.constant 0.000000e+00 : f32
    %6 = vector.broadcast %cst_5 : f32 to vector<8x784xf32>
    %7 = arith.maximumf %5, %6 : vector<8x784xf32>
    %c0_6 = arith.constant 0 : index
    %c0_7 = arith.constant 0 : index
    %8 = vector.load %arg4[%c0_6, %c0_7] : memref<784x128xf32, #tpu.memory_space<vmem>>, vector<784x128xf32>
    %cst_8 = arith.constant dense<0.000000e+00> : vector<8x128xf32>
    %9 = tpu.matmul %7, %8, %cst_8 {dimension_numbers = #tpu.dot_dimension_numbers<[1], [0], [0], [1], [0, 0, 1, 1], [], []>} : vector<8x784xf32>, vector<784x128xf32>, vector<8x128xf32> -> vector<8x128xf32>
    %c0_9 = arith.constant 0 : index
    %c0_10 = arith.constant 0 : index
    %10 = vector.load %arg5[%c0_9, %c0_10] : memref<1x128xf32, #tpu.memory_space<vmem>>, vector<1x128xf32>
    %11 = vector.broadcast %10 : vector<1x128xf32> to vector<8x128xf32>
    %12 = arith.addf %9, %11 : vector<8x128xf32>
    %cst_11 = arith.constant 0.000000e+00 : f32
    %13 = vector.broadcast %cst_11 : f32 to vector<8x128xf32>
    %14 = arith.maximumf %12, %13 : vector<8x128xf32>
    %c0_12 = arith.constant 0 : index
    %c0_13 = arith.constant 0 : index
    %15 = vector.load %arg6[%c0_12, %c0_13] : memref<128x128xf32, #tpu.memory_space<vmem>>, vector<128x128xf32>
    %cst_14 = arith.constant dense<0.000000e+00> : vector<8x128xf32>
    %16 = tpu.matmul %14, %15, %cst_14 {dimension_numbers = #tpu.dot_dimension_numbers<[1], [0], [0], [1], [0, 0, 1, 1], [], []>} : vector<8x128xf32>, vector<128x128xf32>, vector<8x128xf32> -> vector<8x128xf32>
    %c0_15 = arith.constant 0 : index
    %c0_16 = arith.constant 0 : index
    %17 = vector.load %arg7[%c0_15, %c0_16] : memref<1x128xf32, #tpu.memory_space<vmem>>, vector<1x128xf32>
    %18 = vector.broadcast %17 : vector<1x128xf32> to vector<8x128xf32>
    %19 = arith.addf %16, %18 : vector<8x128xf32>
    %c0_17 = arith.constant 0 : index
    %c0_18 = arith.constant 0 : index
    %20 = vector.load %arg8[%c0_17, %c0_18] : memref<8x128xf32, #tpu.memory_space<vmem>>, vector<8x128xf32>
    tpu.vector_store %arg8[%c0_17, %c0_18], %19 {strides = array<i32>} : memref<8x128xf32, #tpu.memory_space<vmem>>, vector<8x128xf32>,
    return
  }
  func.func @transform_0(%arg0: i32) -> (i32, i32) {
    %c0_i32 = arith.constant 0 : i32
    %c0_i32_0 = arith.constant 0 : i32
    return %arg0, %c0_i32 : i32, i32
  }
  func.func @transform_1(%arg0: i32) -> (i32, i32) {
    %c0_i32 = arith.constant 0 : i32
    %c0_i32_0 = arith.constant 0 : i32
    %c0_i32_1 = arith.constant 0 : i32
    return %c0_i32, %c0_i32_0 : i32, i32
  }
  func.func @transform_2(%arg0: i32) -> (i32, i32) {
    %c0_i32 = arith.constant 0 : i32
    %c0_i32_0 = arith.constant 0 : i32
    %c0_i32_1 = arith.constant 0 : i32
    return %c0_i32, %c0_i32_0 : i32, i32
  }
  func.func @transform_3(%arg0: i32) -> (i32, i32) {
    %c0_i32 = arith.constant 0 : i32
    %c0_i32_0 = arith.constant 0 : i32
    %c0_i32_1 = arith.constant 0 : i32
    return %c0_i32, %c0_i32_0 : i32, i32
  }
  func.func @transform_4(%arg0: i32) -> (i32, i32) {
    %c0_i32 = arith.constant 0 : i32
    %c0_i32_0 = arith.constant 0 : i32
    %c0_i32_1 = arith.constant 0 : i32
    return %c0_i32, %c0_i32_0 : i32, i32
  }
  func.func @transform_5(%arg0: i32) -> (i32, i32) {
    %c0_i32 = arith.constant 0 : i32
    %c0_i32_0 = arith.constant 0 : i32
    %c0_i32_1 = arith.constant 0 : i32
    return %c0_i32, %c0_i32_0 : i32, i32
  }
  func.func @transform_6(%arg0: i32) -> (i32, i32) {
    %c0_i32 = arith.constant 0 : i32
    %c0_i32_0 = arith.constant 0 : i32
    %c0_i32_1 = arith.constant 0 : i32
    return %c0_i32, %c0_i32_0 : i32, i32
  }
  func.func @transform_7(%arg0: i32) -> (i32, i32) {
    %c0_i32 = arith.constant 0 : i32
    %c0_i32_0 = arith.constant 0 : i32
    return %arg0, %c0_i32 : i32, i32
  }
}

</mosaic_0001>

<llo_original>
// kernel: _lambda_.1
$region0: #{_lambda_.1}
  #allocation0 [shape = 'u32[]', space=smem, size = 0x4, offset = 0x4, fixed_abs, tag = 'smem constant byte address 0x4 - core index']
  #allocation1 [shape = 'u32[72,128]{1,0:T(1,128)}', space=vmem, size = 0x9000, scoped, tag = 'internal scratch']
  %s0 = inlined_call_operand.vmem [shape: f32[8,1024], index: 0, kind: input, shape index: {}]
  %s1 = inlined_call_operand.hbm [shape: f32[1024,784], index: 1, kind: input, shape index: {}]
  %s2 = inlined_call_operand.hbm [shape: f32[1,784], index: 2, kind: input, shape index: {}]
  %s3 = inlined_call_operand.hbm [shape: f32[784,128], index: 3, kind: input, shape index: {}]
  %s4 = inlined_call_operand.hbm [shape: f32[1,128], index: 4, kind: input, shape index: {}]
  %s5 = inlined_call_operand.hbm [shape: f32[128,128], index: 5, kind: input, shape index: {}]
  %s6 = inlined_call_operand.hbm [shape: f32[1,128], index: 6, kind: input, shape index: {}]
  %s7 = inlined_call_operand.vmem [shape: f32[8,128], index: 7, kind: output, shape index: {}]
  %s8 = sld [smem:[#allocation0]]
  $region62: #{_lambda_.1} parent=0
    _
  %s10 = ssub.s32 1, %s8
  %s11 = scalar_select 0, %s10, %s8
  $region1: #{_lambda_.1} parent=0
    #allocation2 [shape = 'u8[3670016]{0}', space=vmem, size = 0x380000, scoped, tag = 'input window, operand 1, single buffered']
    #allocation3 [shape = 's32[1]{0}', space=sflag, size = 0x4, scoped, tag = 'scoped memory for _lambda_.1']
    #allocation4 [shape = 'u8[3584]{0}', space=vmem, size = 0x1000, scoped, tag = 'input window, operand 2, single buffered']
    #allocation5 [shape = 's32[1]{0}', space=sflag, size = 0x4, scoped, tag = 'scoped memory for _lambda_.1']
    #allocation6 [shape = 'u8[401408]{0}', space=vmem, size = 0x62000, scoped, tag = 'input window, operand 3, single buffered']
    #allocation7 [shape = 'u8[512]{0}', space=vmem, size = 0x400, scoped, tag = 'input window, operand 4, single buffered']
    #allocation8 [shape = 's32[1]{0}', space=sflag, size = 0x4, scoped, tag = 'scoped memory for _lambda_.1']
    #allocation9 [shape = 'u8[65536]{0}', space=vmem, size = 0x10000, scoped, tag = 'input window, operand 5, single buffered']
    #allocation10 [shape = 'u8[512]{0}', space=vmem, size = 0x400, scoped, tag = 'input window, operand 6, single buffered']
    #allocation11 [shape = 's32[1]{0}', space=sflag, size = 0x4, scoped, tag = 'scoped memory for _lambda_.1']
    %12 = vsyncpa [#allocation3], 0
    %13 = vsyncpa [#allocation5], 0
    %14 = vsyncpa [#allocation8], 0
    %15 = vsyncpa [#allocation11], 0
    // Predicated region
    $region2: #{_lambda_.1} parent=1 // pred_check
      _
    $region3: #{_lambda_.1} parent=1 // pred_check_branch
      %17 = sbr.rel (0) target = $region5
    $region4: #{_lambda_.1} parent=1 // pred_region
      _
    $region5: #{_lambda_.1} parent=1 // pred_fallthru
      _
    // Predicated region
    $region6: #{_lambda_.1} parent=1 // pred_check
      _
    $region7: #{_lambda_.1} parent=1 // pred_check_branch
      %19 = sbr.rel (0) target = $region9
    $region8: #{_lambda_.1} parent=1 // pred_region
      %21 = vsyncadd [#allocation3], 0
      %s22 = sshll.u32 %s1, 4
      %s23 = int_to_ptr.hbm [resolvable:$true] %s22
      %s24 = sshll.u32 [#allocation2], 4
      %s25 = int_to_ptr.vmem [resolvable:$true] %s24
      %30 = dma.hbm_to_vmem [thread:$0]  %s23, 114688, %s25, [#allocation3], 896, 896, 56
    $region9: #{_lambda_.1} parent=1 // pred_fallthru
      _
    // Predicated region
    $region10: #{_lambda_.1} parent=1 // pred_check
      _
    $region11: #{_lambda_.1} parent=1 // pred_check_branch
      %32 = sbr.rel (0) target = $region13
    $region12: #{_lambda_.1} parent=1 // pred_region
      %34 = vsyncadd [#allocation5], 0
      %s36 = sshll.u32 %s2, 4
      %s37 = int_to_ptr.hbm [resolvable:$true] %s36
      %s38 = sshll.u32 [#allocation4], 4
      %s39 = int_to_ptr.vmem [resolvable:$true] %s38
      %41 = dma.hbm_to_vmem [thread:$0]  %s37, 112, %s39, [#allocation5]
    $region13: #{_lambda_.1} parent=1 // pred_fallthru
      _
    // Predicated region
    $region14: #{_lambda_.1} parent=1 // pred_check
      _
    $region15: #{_lambda_.1} parent=1 // pred_check_branch
      %43 = sbr.rel (0) target = $region17
    $region16: #{_lambda_.1} parent=1 // pred_region
      %45 = vsyncadd [#allocation5], 0
      %s46 = sshll.u32 %s3, 4
      %s47 = int_to_ptr.hbm [resolvable:$true] %s46
      %s48 = sshll.u32 [#allocation6], 4
      %s49 = int_to_ptr.vmem [resolvable:$true] %s48
      %54 = dma.hbm_to_vmem [thread:$0]  %s47, 12544, %s49, [#allocation5], 128, 128, 8
    $region17: #{_lambda_.1} parent=1 // pred_fallthru
      _
    // Predicated region
    $region18: #{_lambda_.1} parent=1 // pred_check
      _
    $region19: #{_lambda_.1} parent=1 // pred_check_branch
      %56 = sbr.rel (0) target = $region21
    $region20: #{_lambda_.1} parent=1 // pred_region
      %58 = vsyncadd [#allocation8], 0
      %s60 = sshll.u32 %s4, 4
      %s61 = int_to_ptr.hbm [resolvable:$true] %s60
      %s62 = sshll.u32 [#allocation7], 4
      %s63 = int_to_ptr.vmem [resolvable:$true] %s62
      %65 = dma.hbm_to_vmem [thread:$0]  %s61, 16, %s63, [#allocation8]
    $region21: #{_lambda_.1} parent=1 // pred_fallthru
      _
    // Predicated region
    $region22: #{_lambda_.1} parent=1 // pred_check
      _
    $region23: #{_lambda_.1} parent=1 // pred_check_branch
      %67 = sbr.rel (0) target = $region25
    $region24: #{_lambda_.1} parent=1 // pred_region
      %69 = vsyncadd [#allocation8], 0
      %s70 = sshll.u32 %s5, 4
      %s71 = int_to_ptr.hbm [resolvable:$true] %s70
      %s72 = sshll.u32 [#allocation9], 4
      %s73 = int_to_ptr.vmem [resolvable:$true] %s72
      %78 = dma.hbm_to_vmem [thread:$0]  %s71, 2048, %s73, [#allocation8], 128, 128, 8
    $region25: #{_lambda_.1} parent=1 // pred_fallthru
      _
    // Predicated region
    $region26: #{_lambda_.1} parent=1 // pred_check
      _
    $region27: #{_lambda_.1} parent=1 // pred_check_branch
      %80 = sbr.rel (0) target = $region29
    $region28: #{_lambda_.1} parent=1 // pred_region
      %82 = vsyncadd [#allocation11], 0
      %s84 = sshll.u32 %s6, 4
      %s85 = int_to_ptr.hbm [resolvable:$true] %s84
      %s86 = sshll.u32 [#allocation10], 4
      %s87 = int_to_ptr.vmem [resolvable:$true] %s86
      %89 = dma.hbm_to_vmem [thread:$0]  %s85, 16, %s87, [#allocation11]
    $region29: #{_lambda_.1} parent=1 // pred_fallthru
      _
    // Predicated region
    $region30: #{_lambda_.1} parent=1 // pred_check
      _
    $region31: #{_lambda_.1} parent=1 // pred_check_branch
      %91 = sbr.rel (0) target = $region33
    $region32: #{_lambda_.1} parent=1 // pred_region
      %93 = dma.done [#allocation3], 114688
    $region33: #{_lambda_.1} parent=1 // pred_fallthru
      _
    // Predicated region
    $region34: #{_lambda_.1} parent=1 // pred_check
      _
    $region35: #{_lambda_.1} parent=1 // pred_check_branch
      %95 = sbr.rel (0) target = $region37
    $region36: #{_lambda_.1} parent=1 // pred_region
      %97 = dma.done [#allocation5], 112
    $region37: #{_lambda_.1} parent=1 // pred_fallthru
      _
    // Predicated region
    $region38: #{_lambda_.1} parent=1 // pred_check
      _
    $region39: #{_lambda_.1} parent=1 // pred_check_branch
      %99 = sbr.rel (0) target = $region41
    $region40: #{_lambda_.1} parent=1 // pred_region
      %101 = dma.done [#allocation5], 12544
    $region41: #{_lambda_.1} parent=1 // pred_fallthru
      _
    // Predicated region
    $region42: #{_lambda_.1} parent=1 // pred_check
      _
    $region43: #{_lambda_.1} parent=1 // pred_check_branch
      %103 = sbr.rel (0) target = $region45
    $region44: #{_lambda_.1} parent=1 // pred_region
      %105 = dma.done [#allocation8], 16
    $region45: #{_lambda_.1} parent=1 // pred_fallthru
      _
    // Predicated region
    $region46: #{_lambda_.1} parent=1 // pred_check
      _
    $region47: #{_lambda_.1} parent=1 // pred_check_branch
      %107 = sbr.rel (0) target = $region49
    $region48: #{_lambda_.1} parent=1 // pred_region
      %109 = dma.done [#allocation8], 2048
    $region49: #{_lambda_.1} parent=1 // pred_fallthru
      _
    // Predicated region
    $region50: #{_lambda_.1} parent=1 // pred_check
      _
    $region51: #{_lambda_.1} parent=1 // pred_check_branch
      %111 = sbr.rel (0) target = $region53
    $region52: #{_lambda_.1} parent=1 // pred_region
      %113 = dma.done [#allocation11], 16
    $region53: #{_lambda_.1} parent=1 // pred_fallthru
      _
    %v114 = vld [vmem:[%s0] sm:$0xff]
    %v115 = vld [vmem:[%s0 + $0x8] sm:$0xff]
    %v116 = vld [vmem:[%s0 + $0x10] sm:$0xff]
    %v117 = vld [vmem:[%s0 + $0x18] sm:$0xff]
    %v118 = vld [vmem:[%s0 + $0x20] sm:$0xff]
    %v119 = vld [vmem:[%s0 + $0x28] sm:$0xff]
    %v120 = vld [vmem:[%s0 + $0x30] sm:$0xff]
    %v121 = vld [vmem:[%s0 + $0x38] sm:$0xff]
    %v122 = vld [vmem:[#allocation2] sm:$0xff]
    %v123 = vld [vmem:[#allocation2 + $0x8] sm:$0xff]
    %v124 = vld [vmem:[#allocation2 + $0x10] sm:$0xff]
    %v125 = vld [vmem:[#allocation2 + $0x18] sm:$0xff]
    %v126 = vld [vmem:[#allocation2 + $0x20] sm:$0xff]
    %v127 = vld [vmem:[#allocation2 + $0x28] sm:$0xff]
    %v128 = vld [vmem:[#allocation2 + $0x30] sm:$0xff]
    %v129 = vld [vmem:[#allocation2 + $0x38] sm:$0xff]
    %v130 = vld [vmem:[#allocation2 + $0x40] sm:$0xff]
    %v131 = vld [vmem:[#allocation2 + $0x48] sm:$0xff]
    %v132 = vld [vmem:[#allocation2 + $0x50] sm:$0xff]
    %v133 = vld [vmem:[#allocation2 + $0x58] sm:$0xff]
    %v134 = vld [vmem:[#allocation2 + $0x60] sm:$0xff]
    %v135 = vld [vmem:[#allocation2 + $0x68] sm:$0xff]
    %v136 = vld [vmem:[#allocation2 + $0x70] sm:$0xff]
    %v137 = vld [vmem:[#allocation2 + $0x78] sm:$0xff]
    %v138 = vld [vmem:[#allocation2 + $0x80] sm:$0xff]
    %v139 = vld [vmem:[#allocation2 + $0x88] sm:$0xff]
    %v140 = vld [vmem:[#allocation2 + $0x90] sm:$0xff]
    %v141 = vld [vmem:[#allocation2 + $0x98] sm:$0xff]
    %v142 = vld [vmem:[#allocation2 + $0xa0] sm:$0xff]
    %v143 = vld [vmem:[#allocation2 + $0xa8] sm:$0xff]
    %v144 = vld [vmem:[#allocation2 + $0xb0] sm:$0xff]
    %v145 = vld [vmem:[#allocation2 + $0xb8] sm:$0xff]
    %v146 = vld [vmem:[#allocation2 + $0xc0] sm:$0xff]
    %v147 = vld [vmem:[#allocation2 + $0xc8] sm:$0xff]
    %v148 = vld [vmem:[#allocation2 + $0xd0] sm:$0xff]
    %v149 = vld [vmem:[#allocation2 + $0xd8] sm:$0xff]
    %v150 = vld [vmem:[#allocation2 + $0xe0] sm:$0xff]
    %v151 = vld [vmem:[#allocation2 + $0xe8] sm:$0xff]
    %v152 = vld [vmem:[#allocation2 + $0xf0] sm:$0xff]
    %v153 = vld [vmem:[#allocation2 + $0xf8] sm:$0xff]
    %v154 = vld [vmem:[#allocation2 + $0x100] sm:$0xff]
    %v155 = vld [vmem:[#allocation2 + $0x108] sm:$0xff]
    %v156 = vld [vmem:[#allocation2 + $0x110] sm:$0xff]
    %v157 = vld [vmem:[#allocation2 + $0x118] sm:$0xff]
    %v158 = vld [vmem:[#allocation2 + $0x120] sm:$0xff]
    %v159 = vld [vmem:[#allocation2 + $0x128] sm:$0xff]
    %v160 = vld [vmem:[#allocation2 + $0x130] sm:$0xff]
    %v161 = vld [vmem:[#allocation2 + $0x138] sm:$0xff]
    %v162 = vld [vmem:[#allocation2 + $0x140] sm:$0xff]
    %v163 = vld [vmem:[#allocation2 + $0x148] sm:$0xff]
    %v164 = vld [vmem:[#allocation2 + $0x150] sm:$0xff]
    %v165 = vld [vmem:[#allocation2 + $0x158] sm:$0xff]
    %v166 = vld [vmem:[#allocation2 + $0x160] sm:$0xff]
    %v167 = vld [vmem:[#allocation2 + $0x168] sm:$0xff]
    %v168 = vld [vmem:[#allocation2 + $0x170] sm:$0xff]
    %v169 = vld [vmem:[#allocation2 + $0x178] sm:$0xff]
    %v170 = vld [vmem:[#allocation2 + $0x180] sm:$0xff]
    %v171 = vld [vmem:[#allocation2 + $0x188] sm:$0xff]
    %v172 = vld [vmem:[#allocation2 + $0x190] sm:$0xff]
    %v173 = vld [vmem:[#allocation2 + $0x198] sm:$0xff]
    %v174 = vld [vmem:[#allocation2 + $0x1a0] sm:$0xff]
    %v175 = vld [vmem:[#allocation2 + $0x1a8] sm:$0xff]
    %v176 = vld [vmem:[#allocation2 + $0x1b0] sm:$0xff]
    %v177 = vld [vmem:[#allocation2 + $0x1b8] sm:$0xff]
    %v178 = vld [vmem:[#allocation2 + $0x1c0] sm:$0xff]
    %v179 = vld [vmem:[#allocation2 + $0x1c8] sm:$0xff]
    %v180 = vld [vmem:[#allocation2 + $0x1d0] sm:$0xff]
    %v181 = vld [vmem:[#allocation2 + $0x1d8] sm:$0xff]
    %v182 = vld [vmem:[#allocation2 + $0x1e0] sm:$0xff]
    %v183 = vld [vmem:[#allocation2 + $0x1e8] sm:$0xff]
    %v184 = vld [vmem:[#allocation2 + $0x1f0] sm:$0xff]
    %v185 = vld [vmem:[#allocation2 + $0x1f8] sm:$0xff]
    %v186 = vld [vmem:[#allocation2 + $0x200] sm:$0xff]
    %v187 = vld [vmem:[#allocation2 + $0x208] sm:$0xff]
    %v188 = vld [vmem:[#allocation2 + $0x210] sm:$0xff]
    %v189 = vld [vmem:[#allocation2 + $0x218] sm:$0xff]
    %v190 = vld [vmem:[#allocation2 + $0x220] sm:$0xff]
    %v191 = vld [vmem:[#allocation2 + $0x228] sm:$0xff]
    %v192 = vld [vmem:[#allocation2 + $0x230] sm:$0xff]
    %v193 = vld [vmem:[#allocation2 + $0x238] sm:$0xff]
    %v194 = vld [vmem:[#allocation2 + $0x240] sm:$0xff]
    %v195 = vld [vmem:[#allocation2 + $0x248] sm:$0xff]
    %v196 = vld [vmem:[#allocation2 + $0x250] sm:$0xff]
    %v197 = vld [vmem:[#allocation2 + $0x258] sm:$0xff]
    %v198 = vld [vmem:[#allocation2 + $0x260] sm:$0xff]
    %v199 = vld [vmem:[#allocation2 + $0x268] sm:$0xff]
    %v200 = vld [vmem:[#allocation2 + $0x270] sm:$0xff]
    %v201 = vld [vmem:[#allocation2 + $0x278] sm:$0xff]
    %v202 = vld [vmem:[#allocation2 + $0x280] sm:$0xff]
    %v203 = vld [vmem:[#allocation2 + $0x288] sm:$0xff]
    %v204 = vld [vmem:[#allocation2 + $0x290] sm:$0xff]
    %v205 = vld [vmem:[#allocation2 + $0x298] sm:$0xff]
    %v206 = vld [vmem:[#allocation2 + $0x2a0] sm:$0xff]
    %v207 = vld [vmem:[#allocation2 + $0x2a8] sm:$0xff]
    %v208 = vld [vmem:[#allocation2 + $0x2b0] sm:$0xff]
    %v209 = vld [vmem:[#allocation2 + $0x2b8] sm:$0xff]
    %v210 = vld [vmem:[#allocation2 + $0x2c0] sm:$0xff]
    %v211 = vld [vmem:[#allocation2 + $0x2c8] sm:$0xff]
    %v212 = vld [vmem:[#allocation2 + $0x2d0] sm:$0xff]
    %v213 = vld [vmem:[#allocation2 + $0x2d8] sm:$0xff]
    %v214 = vld [vmem:[#allocation2 + $0x2e0] sm:$0xff]
    %v215 = vld [vmem:[#allocation2 + $0x2e8] sm:$0xff]
    %v216 = vld [vmem:[#allocation2 + $0x2f0] sm:$0xff]
    %v217 = vld [vmem:[#allocation2 + $0x2f8] sm:$0xff]
    %v218 = vld [vmem:[#allocation2 + $0x300] sm:$0xff]
    %v219 = vld [vmem:[#allocation2 + $0x308] sm:$0xff]
    %v220 = vld [vmem:[#allocation2 + $0x310] sm:$0xff]
    %v221 = vld [vmem:[#allocation2 + $0x318] sm:$0xff]
    %v222 = vld [vmem:[#allocation2 + $0x320] sm:$0xff]
    %v223 = vld [vmem:[#allocation2 + $0x328] sm:$0xff]
    %v224 = vld [vmem:[#allocation2 + $0x330] sm:$0xff]
    %v225 = vld [vmem:[#allocation2 + $0x338] sm:$0xff]
    %v226 = vld [vmem:[#allocation2 + $0x340] sm:$0xff]
    %v227 = vld [vmem:[#allocation2 + $0x348] sm:$0xff]
    %v228 = vld [vmem:[#allocation2 + $0x350] sm:$0xff]
    %v229 = vld [vmem:[#allocation2 + $0x358] sm:$0xff]
    %v230 = vld [vmem:[#allocation2 + $0x360] sm:$0xff]
    %v231 = vld [vmem:[#allocation2 + $0x368] sm:$0xff]
    %v232 = vld [vmem:[#allocation2 + $0x370] sm:$0xff]
    %v233 = vld [vmem:[#allocation2 + $0x378] sm:$0xff]
    %v234 = vld [vmem:[#allocation2 + $0x380] sm:$0xff]
    %v235 = vld [vmem:[#allocation2 + $0x388] sm:$0xff]
    %v236 = vld [vmem:[#allocation2 + $0x390] sm:$0xff]
    %v237 = vld [vmem:[#allocation2 + $0x398] sm:$0xff]
    %v238 = vld [vmem:[#allocation2 + $0x3a0] sm:$0xff]
    %v239 = vld [vmem:[#allocation2 + $0x3a8] sm:$0xff]
    %v240 = vld [vmem:[#allocation2 + $0x3b0] sm:$0xff]
    %v241 = vld [vmem:[#allocation2 + $0x3b8] sm:$0xff]
    %v242 = vld [vmem:[#allocation2 + $0x3c0] sm:$0xff]
    %v243 = vld [vmem:[#allocation2 + $0x3c8] sm:$0xff]
    %v244 = vld [vmem:[#allocation2 + $0x3d0] sm:$0xff]
    %v245 = vld [vmem:[#allocation2 + $0x3d8] sm:$0xff]
    %v246 = vld [vmem:[#allocation2 + $0x3e0] sm:$0xff]
    %v247 = vld [vmem:[#allocation2 + $0x3e8] sm:$0xff]
    %v248 = vld [vmem:[#allocation2 + $0x3f0] sm:$0xff]
    %v249 = vld [vmem:[#allocation2 + $0x3f8] sm:$0xff]
    %v250 = vld [vmem:[#allocation2 + $0x400] sm:$0xff]
    %v251 = vld [vmem:[#allocation2 + $0x408] sm:$0xff]
    %v252 = vld [vmem:[#allocation2 + $0x410] sm:$0xff]
    %v253 = vld [vmem:[#allocation2 + $0x418] sm:$0xff]
    %v254 = vld [vmem:[#allocation2 + $0x420] sm:$0xff]
    %v255 = vld [vmem:[#allocation2 + $0x428] sm:$0xff]
    %v256 = vld [vmem:[#allocation2 + $0x430] sm:$0xff]
    %v257 = vld [vmem:[#allocation2 + $0x438] sm:$0xff]
    %v258 = vld [vmem:[#allocation2 + $0x440] sm:$0xff]
    %v259 = vld [vmem:[#allocation2 + $0x448] sm:$0xff]
    %v260 = vld [vmem:[#allocation2 + $0x450] sm:$0xff]
    %v261 = vld [vmem:[#allocation2 + $0x458] sm:$0xff]
    %v262 = vld [vmem:[#allocation2 + $0x460] sm:$0xff]
    %v263 = vld [vmem:[#allocation2 + $0x468] sm:$0xff]
    %v264 = vld [vmem:[#allocation2 + $0x470] sm:$0xff]
    %v265 = vld [vmem:[#allocation2 + $0x478] sm:$0xff]
    %v266 = vld [vmem:[#allocation2 + $0x480] sm:$0xff]
    %v267 = vld [vmem:[#allocation2 + $0x488] sm:$0xff]
    %v268 = vld [vmem:[#allocation2 + $0x490] sm:$0xff]
    %v269 = vld [vmem:[#allocation2 + $0x498] sm:$0xff]
    %v270 = vld [vmem:[#allocation2 + $0x4a0] sm:$0xff]
    %v271 = vld [vmem:[#allocation2 + $0x4a8] sm:$0xff]
    %v272 = vld [vmem:[#allocation2 + $0x4b0] sm:$0xff]
    %v273 = vld [vmem:[#allocation2 + $0x4b8] sm:$0xff]
    %v274 = vld [vmem:[#allocation2 + $0x4c0] sm:$0xff]
    %v275 = vld [vmem:[#allocation2 + $0x4c8] sm:$0xff]
    %v276 = vld [vmem:[#allocation2 + $0x4d0] sm:$0xff]
    %v277 = vld [vmem:[#allocation2 + $0x4d8] sm:$0xff]
    %v278 = vld [vmem:[#allocation2 + $0x4e0] sm:$0xff]
    %v279 = vld [vmem:[#allocation2 + $0x4e8] sm:$0xff]
    %v280 = vld [vmem:[#allocation2 + $0x4f0] sm:$0xff]
    %v281 = vld [vmem:[#allocation2 + $0x4f8] sm:$0xff]
    %v282 = vld [vmem:[#allocation2 + $0x500] sm:$0xff]
    %v283 = vld [vmem:[#allocation2 + $0x508] sm:$0xff]
    %v284 = vld [vmem:[#allocation2 + $0x510] sm:$0xff]
    %v285 = vld [vmem:[#allocation2 + $0x518] sm:$0xff]
    %v286 = vld [vmem:[#allocation2 + $0x520] sm:$0xff]
    %v287 = vld [vmem:[#allocation2 + $0x528] sm:$0xff]
    %v288 = vld [vmem:[#allocation2 + $0x530] sm:$0xff]
    %v289 = vld [vmem:[#allocation2 + $0x538] sm:$0xff]
    %v290 = vld [vmem:[#allocation2 + $0x540] sm:$0xff]
    %v291 = vld [vmem:[#allocation2 + $0x548] sm:$0xff]
    %v292 = vld [vmem:[#allocation2 + $0x550] sm:$0xff]
    %v293 = vld [vmem:[#allocation2 + $0x558] sm:$0xff]
    %v294 = vld [vmem:[#allocation2 + $0x560] sm:$0xff]
    %v295 = vld [vmem:[#allocation2 + $0x568] sm:$0xff]
    %v296 = vld [vmem:[#allocation2 + $0x570] sm:$0xff]
    %v297 = vld [vmem:[#allocation2 + $0x578] sm:$0xff]
    %v298 = vld [vmem:[#allocation2 + $0x580] sm:$0xff]
    %v299 = vld [vmem:[#allocation2 + $0x588] sm:$0xff]
    %v300 = vld [vmem:[#allocation2 + $0x590] sm:$0xff]
    %v301 = vld [vmem:[#allocation2 + $0x598] sm:$0xff]
    %v302 = vld [vmem:[#allocation2 + $0x5a0] sm:$0xff]
    %v303 = vld [vmem:[#allocation2 + $0x5a8] sm:$0xff]
    %v304 = vld [vmem:[#allocation2 + $0x5b0] sm:$0xff]
    %v305 = vld [vmem:[#allocation2 + $0x5b8] sm:$0xff]
    %v306 = vld [vmem:[#allocation2 + $0x5c0] sm:$0xff]
    %v307 = vld [vmem:[#allocation2 + $0x5c8] sm:$0xff]
    %v308 = vld [vmem:[#allocation2 + $0x5d0] sm:$0xff]
    %v309 = vld [vmem:[#allocation2 + $0x5d8] sm:$0xff]
    %v310 = vld [vmem:[#allocation2 + $0x5e0] sm:$0xff]
    %v311 = vld [vmem:[#allocation2 + $0x5e8] sm:$0xff]
    %v312 = vld [vmem:[#allocation2 + $0x5f0] sm:$0xff]
    %v313 = vld [vmem:[#allocation2 + $0x5f8] sm:$0xff]
    %v314 = vld [vmem:[#allocation2 + $0x600] sm:$0xff]
    %v315 = vld [vmem:[#allocation2 + $0x608] sm:$0xff]
    %v316 = vld [vmem:[#allocation2 + $0x610] sm:$0xff]
    %v317 = vld [vmem:[#allocation2 + $0x618] sm:$0xff]
    %v318 = vld [vmem:[#allocation2 + $0x620] sm:$0xff]
    %v319 = vld [vmem:[#allocation2 + $0x628] sm:$0xff]
    %v320 = vld [vmem:[#allocation2 + $0x630] sm:$0xff]
    %v321 = vld [vmem:[#allocation2 + $0x638] sm:$0xff]
    %v322 = vld [vmem:[#allocation2 + $0x640] sm:$0xff]
    %v323 = vld [vmem:[#allocation2 + $0x648] sm:$0xff]
    %v324 = vld [vmem:[#allocation2 + $0x650] sm:$0xff]
    %v325 = vld [vmem:[#allocation2 + $0x658] sm:$0xff]
    %v326 = vld [vmem:[#allocation2 + $0x660] sm:$0xff]
    %v327 = vld [vmem:[#allocation2 + $0x668] sm:$0xff]
    %v328 = vld [vmem:[#allocation2 + $0x670] sm:$0xff]
    %v329 = vld [vmem:[#allocation2 + $0x678] sm:$0xff]
    %v330 = vld [vmem:[#allocation2 + $0x680] sm:$0xff]
    %v331 = vld [vmem:[#allocation2 + $0x688] sm:$0xff]
    %v332 = vld [vmem:[#allocation2 + $0x690] sm:$0xff]
    %v333 = vld [vmem:[#allocation2 + $0x698] sm:$0xff]
    %v334 = vld [vmem:[#allocation2 + $0x6a0] sm:$0xff]
    %v335 = vld [vmem:[#allocation2 + $0x6a8] sm:$0xff]
    %v336 = vld [vmem:[#allocation2 + $0x6b0] sm:$0xff]
    %v337 = vld [vmem:[#allocation2 + $0x6b8] sm:$0xff]
    %v338 = vld [vmem:[#allocation2 + $0x6c0] sm:$0xff]
    %v339 = vld [vmem:[#allocation2 + $0x6c8] sm:$0xff]
    %v340 = vld [vmem:[#allocation2 + $0x6d0] sm:$0xff]
    %v341 = vld [vmem:[#allocation2 + $0x6d8] sm:$0xff]
    %v342 = vld [vmem:[#allocation2 + $0x6e0] sm:$0xff]
    %v343 = vld [vmem:[#allocation2 + $0x6e8] sm:$0xff]
    %v344 = vld [vmem:[#allocation2 + $0x6f0] sm:$0xff]
    %v345 = vld [vmem:[#allocation2 + $0x6f8] sm:$0xff]
    %v346 = vld [vmem:[#allocation2 + $0x700] sm:$0xff]
    %v347 = vld [vmem:[#allocation2 + $0x708] sm:$0xff]
    %v348 = vld [vmem:[#allocation2 + $0x710] sm:$0xff]
    %v349 = vld [vmem:[#allocation2 + $0x718] sm:$0xff]
    %v350 = vld [vmem:[#allocation2 + $0x720] sm:$0xff]
    %v351 = vld [vmem:[#allocation2 + $0x728] sm:$0xff]
    %v352 = vld [vmem:[#allocation2 + $0x730] sm:$0xff]
    %v353 = vld [vmem:[#allocation2 + $0x738] sm:$0xff]
    %v354 = vld [vmem:[#allocation2 + $0x740] sm:$0xff]
    %v355 = vld [vmem:[#allocation2 + $0x748] sm:$0xff]
    %v356 = vld [vmem:[#allocation2 + $0x750] sm:$0xff]
    %v357 = vld [vmem:[#allocation2 + $0x758] sm:$0xff]
    %v358 = vld [vmem:[#allocation2 + $0x760] sm:$0xff]
    %v359 = vld [vmem:[#allocation2 + $0x768] sm:$0xff]
    %v360 = vld [vmem:[#allocation2 + $0x770] sm:$0xff]
    %v361 = vld [vmem:[#allocation2 + $0x778] sm:$0xff]
    %v362 = vld [vmem:[#allocation2 + $0x780] sm:$0xff]
    %v363 = vld [vmem:[#allocation2 + $0x788] sm:$0xff]
    %v364 = vld [vmem:[#allocation2 + $0x790] sm:$0xff]
    %v365 = vld [vmem:[#allocation2 + $0x798] sm:$0xff]
    %v366 = vld [vmem:[#allocation2 + $0x7a0] sm:$0xff]
    %v367 = vld [vmem:[#allocation2 + $0x7a8] sm:$0xff]
    %v368 = vld [vmem:[#allocation2 + $0x7b0] sm:$0xff]
    %v369 = vld [vmem:[#allocation2 + $0x7b8] sm:$0xff]
    %v370 = vld [vmem:[#allocation2 + $0x7c0] sm:$0xff]
    %v371 = vld [vmem:[#allocation2 + $0x7c8] sm:$0xff]
    %v372 = vld [vmem:[#allocation2 + $0x7d0] sm:$0xff]
    %v373 = vld [vmem:[#allocation2 + $0x7d8] sm:$0xff]
    %v374 = vld [vmem:[#allocation2 + $0x7e0] sm:$0xff]
    %v375 = vld [vmem:[#allocation2 + $0x7e8] sm:$0xff]
    %v376 = vld [vmem:[#allocation2 + $0x7f0] sm:$0xff]
    %v377 = vld [vmem:[#allocation2 + $0x7f8] sm:$0xff]
    %v378 = vld [vmem:[#allocation2 + $0x800] sm:$0xff]
    %v379 = vld [vmem:[#allocation2 + $0x808] sm:$0xff]
    %v380 = vld [vmem:[#allocation2 + $0x810] sm:$0xff]
    %v381 = vld [vmem:[#allocation2 + $0x818] sm:$0xff]
    %v382 = vld [vmem:[#allocation2 + $0x820] sm:$0xff]
    %v383 = vld [vmem:[#allocation2 + $0x828] sm:$0xff]
    %v384 = vld [vmem:[#allocation2 + $0x830] sm:$0xff]
    %v385 = vld [vmem:[#allocation2 + $0x838] sm:$0xff]
    %v386 = vld [vmem:[#allocation2 + $0x840] sm:$0xff]
    %v387 = vld [vmem:[#allocation2 + $0x848] sm:$0xff]
    %v388 = vld [vmem:[#allocation2 + $0x850] sm:$0xff]
    %v389 = vld [vmem:[#allocation2 + $0x858] sm:$0xff]
    %v390 = vld [vmem:[#allocation2 + $0x860] sm:$0xff]
    %v391 = vld [vmem:[#allocation2 + $0x868] sm:$0xff]
    %v392 = vld [vmem:[#allocation2 + $0x870] sm:$0xff]
    %v393 = vld [vmem:[#allocation2 + $0x878] sm:$0xff]
    %v394 = vld [vmem:[#allocation2 + $0x880] sm:$0xff]
    %v395 = vld [vmem:[#allocation2 + $0x888] sm:$0xff]
    %v396 = vld [vmem:[#allocation2 + $0x890] sm:$0xff]
    %v397 = vld [vmem:[#allocation2 + $0x898] sm:$0xff]
    %v398 = vld [vmem:[#allocation2 + $0x8a0] sm:$0xff]
    %v399 = vld [vmem:[#allocation2 + $0x8a8] sm:$0xff]
    %v400 = vld [vmem:[#allocation2 + $0x8b0] sm:$0xff]
    %v401 = vld [vmem:[#allocation2 + $0x8b8] sm:$0xff]
    %v402 = vld [vmem:[#allocation2 + $0x8c0] sm:$0xff]
    %v403 = vld [vmem:[#allocation2 + $0x8c8] sm:$0xff]
    %v404 = vld [vmem:[#allocation2 + $0x8d0] sm:$0xff]
    %v405 = vld [vmem:[#allocation2 + $0x8d8] sm:$0xff]
    %v406 = vld [vmem:[#allocation2 + $0x8e0] sm:$0xff]
    %v407 = vld [vmem:[#allocation2 + $0x8e8] sm:$0xff]
    %v408 = vld [vmem:[#allocation2 + $0x8f0] sm:$0xff]
    %v409 = vld [vmem:[#allocation2 + $0x8f8] sm:$0xff]
    %v410 = vld [vmem:[#allocation2 + $0x900] sm:$0xff]
    %v411 = vld [vmem:[#allocation2 + $0x908] sm:$0xff]
    %v412 = vld [vmem:[#allocation2 + $0x910] sm:$0xff]
    %v413 = vld [vmem:[#allocation2 + $0x918] sm:$0xff]
    %v414 = vld [vmem:[#allocation2 + $0x920] sm:$0xff]
    %v415 = vld [vmem:[#allocation2 + $0x928] sm:$0xff]
    %v416 = vld [vmem:[#allocation2 + $0x930] sm:$0xff]
    %v417 = vld [vmem:[#allocation2 + $0x938] sm:$0xff]
    %v418 = vld [vmem:[#allocation2 + $0x940] sm:$0xff]
    %v419 = vld [vmem:[#allocation2 + $0x948] sm:$0xff]
    %v420 = vld [vmem:[#allocation2 + $0x950] sm:$0xff]
    %v421 = vld [vmem:[#allocation2 + $0x958] sm:$0xff]
    %v422 = vld [vmem:[#allocation2 + $0x960] sm:$0xff]
    %v423 = vld [vmem:[#allocation2 + $0x968] sm:$0xff]
    %v424 = vld [vmem:[#allocation2 + $0x970] sm:$0xff]
    %v425 = vld [vmem:[#allocation2 + $0x978] sm:$0xff]
    %v426 = vld [vmem:[#allocation2 + $0x980] sm:$0xff]
    %v427 = vld [vmem:[#allocation2 + $0x988] sm:$0xff]
    %v428 = vld [vmem:[#allocation2 + $0x990] sm:$0xff]
    %v429 = vld [vmem:[#allocation2 + $0x998] sm:$0xff]
    %v430 = vld [vmem:[#allocation2 + $0x9a0] sm:$0xff]
    %v431 = vld [vmem:[#allocation2 + $0x9a8] sm:$0xff]
    %v432 = vld [vmem:[#allocation2 + $0x9b0] sm:$0xff]
    %v433 = vld [vmem:[#allocation2 + $0x9b8] sm:$0xff]
    %v434 = vld [vmem:[#allocation2 + $0x9c0] sm:$0xff]
    %v435 = vld [vmem:[#allocation2 + $0x9c8] sm:$0xff]
    %v436 = vld [vmem:[#allocation2 + $0x9d0] sm:$0xff]
    %v437 = vld [vmem:[#allocation2 + $0x9d8] sm:$0xff]
    %v438 = vld [vmem:[#allocation2 + $0x9e0] sm:$0xff]
    %v439 = vld [vmem:[#allocation2 + $0x9e8] sm:$0xff]
    %v440 = vld [vmem:[#allocation2 + $0x9f0] sm:$0xff]
    %v441 = vld [vmem:[#allocation2 + $0x9f8] sm:$0xff]
    %v442 = vld [vmem:[#allocation2 + $0xa00] sm:$0xff]
    %v443 = vld [vmem:[#allocation2 + $0xa08] sm:$0xff]
    %v444 = vld [vmem:[#allocation2 + $0xa10] sm:$0xff]
    %v445 = vld [vmem:[#allocation2 + $0xa18] sm:$0xff]
    %v446 = vld [vmem:[#allocation2 + $0xa20] sm:$0xff]
    %v447 = vld [vmem:[#allocation2 + $0xa28] sm:$0xff]
    %v448 = vld [vmem:[#allocation2 + $0xa30] sm:$0xff]
    %v449 = vld [vmem:[#allocation2 + $0xa38] sm:$0xff]
    %v450 = vld [vmem:[#allocation2 + $0xa40] sm:$0xff]
    %v451 = vld [vmem:[#allocation2 + $0xa48] sm:$0xff]
    %v452 = vld [vmem:[#allocation2 + $0xa50] sm:$0xff]
    %v453 = vld [vmem:[#allocation2 + $0xa58] sm:$0xff]
    %v454 = vld [vmem:[#allocation2 + $0xa60] sm:$0xff]
    %v455 = vld [vmem:[#allocation2 + $0xa68] sm:$0xff]
    %v456 = vld [vmem:[#allocation2 + $0xa70] sm:$0xff]
    %v457 = vld [vmem:[#allocation2 + $0xa78] sm:$0xff]
    %v458 = vld [vmem:[#allocation2 + $0xa80] sm:$0xff]
    %v459 = vld [vmem:[#allocation2 + $0xa88] sm:$0xff]
    %v460 = vld [vmem:[#allocation2 + $0xa90] sm:$0xff]
    %v461 = vld [vmem:[#allocation2 + $0xa98] sm:$0xff]
    %v462 = vld [vmem:[#allocation2 + $0xaa0] sm:$0xff]
    %v463 = vld [vmem:[#allocation2 + $0xaa8] sm:$0xff]
    %v464 = vld [vmem:[#allocation2 + $0xab0] sm:$0xff]
    %v465 = vld [vmem:[#allocation2 + $0xab8] sm:$0xff]
    %v466 = vld [vmem:[#allocation2 + $0xac0] sm:$0xff]
    %v467 = vld [vmem:[#allocation2 + $0xac8] sm:$0xff]
    %v468 = vld [vmem:[#allocation2 + $0xad0] sm:$0xff]
    %v469 = vld [vmem:[#allocation2 + $0xad8] sm:$0xff]
    %v470 = vld [vmem:[#allocation2 + $0xae0] sm:$0xff]
    %v471 = vld [vmem:[#allocation2 + $0xae8] sm:$0xff]
    %v472 = vld [vmem:[#allocation2 + $0xaf0] sm:$0xff]
    %v473 = vld [vmem:[#allocation2 + $0xaf8] sm:$0xff]
    %v474 = vld [vmem:[#allocation2 + $0xb00] sm:$0xff]
    %v475 = vld [vmem:[#allocation2 + $0xb08] sm:$0xff]
    %v476 = vld [vmem:[#allocation2 + $0xb10] sm:$0xff]
    %v477 = vld [vmem:[#allocation2 + $0xb18] sm:$0xff]
    %v478 = vld [vmem:[#allocation2 + $0xb20] sm:$0xff]
    %v479 = vld [vmem:[#allocation2 + $0xb28] sm:$0xff]
    %v480 = vld [vmem:[#allocation2 + $0xb30] sm:$0xff]
    %v481 = vld [vmem:[#allocation2 + $0xb38] sm:$0xff]
    %v482 = vld [vmem:[#allocation2 + $0xb40] sm:$0xff]
    %v483 = vld [vmem:[#allocation2 + $0xb48] sm:$0xff]
    %v484 = vld [vmem:[#allocation2 + $0xb50] sm:$0xff]
    %v485 = vld [vmem:[#allocation2 + $0xb58] sm:$0xff]
    %v486 = vld [vmem:[#allocation2 + $0xb60] sm:$0xff]
    %v487 = vld [vmem:[#allocation2 + $0xb68] sm:$0xff]
    %v488 = vld [vmem:[#allocation2 + $0xb70] sm:$0xff]
    %v489 = vld [vmem:[#allocation2 + $0xb78] sm:$0xff]
    %v490 = vld [vmem:[#allocation2 + $0xb80] sm:$0xff]
    %v491 = vld [vmem:[#allocation2 + $0xb88] sm:$0xff]
    %v492 = vld [vmem:[#allocation2 + $0xb90] sm:$0xff]
    %v493 = vld [vmem:[#allocation2 + $0xb98] sm:$0xff]
    %v494 = vld [vmem:[#allocation2 + $0xba0] sm:$0xff]
    %v495 = vld [vmem:[#allocation2 + $0xba8] sm:$0xff]
    %v496 = vld [vmem:[#allocation2 + $0xbb0] sm:$0xff]
    %v497 = vld [vmem:[#allocation2 + $0xbb8] sm:$0xff]
    %v498 = vld [vmem:[#allocation2 + $0xbc0] sm:$0xff]
    %v499 = vld [vmem:[#allocation2 + $0xbc8] sm:$0xff]
    %v500 = vld [vmem:[#allocation2 + $0xbd0] sm:$0xff]
    %v501 = vld [vmem:[#allocation2 + $0xbd8] sm:$0xff]
    %v502 = vld [vmem:[#allocation2 + $0xbe0] sm:$0xff]
    %v503 = vld [vmem:[#allocation2 + $0xbe8] sm:$0xff]
    %v504 = vld [vmem:[#allocation2 + $0xbf0] sm:$0xff]
    %v505 = vld [vmem:[#allocation2 + $0xbf8] sm:$0xff]
    %v506 = vld [vmem:[#allocation2 + $0xc00] sm:$0xff]
    %v507 = vld [vmem:[#allocation2 + $0xc08] sm:$0xff]
    %v508 = vld [vmem:[#allocation2 + $0xc10] sm:$0xff]
    %v509 = vld [vmem:[#allocation2 + $0xc18] sm:$0xff]
    %v510 = vld [vmem:[#allocation2 + $0xc20] sm:$0xff]
    %v511 = vld [vmem:[#allocation2 + $0xc28] sm:$0xff]
    %v512 = vld [vmem:[#allocation2 + $0xc30] sm:$0xff]
    %v513 = vld [vmem:[#allocation2 + $0xc38] sm:$0xff]
    %v514 = vld [vmem:[#allocation2 + $0xc40] sm:$0xff]
    %v515 = vld [vmem:[#allocation2 + $0xc48] sm:$0xff]
    %v516 = vld [vmem:[#allocation2 + $0xc50] sm:$0xff]
    %v517 = vld [vmem:[#allocation2 + $0xc58] sm:$0xff]
    %v518 = vld [vmem:[#allocation2 + $0xc60] sm:$0xff]
    %v519 = vld [vmem:[#allocation2 + $0xc68] sm:$0xff]
    %v520 = vld [vmem:[#allocation2 + $0xc70] sm:$0xff]
    %v521 = vld [vmem:[#allocation2 + $0xc78] sm:$0xff]
    %v522 = vld [vmem:[#allocation2 + $0xc80] sm:$0xff]
    %v523 = vld [vmem:[#allocation2 + $0xc88] sm:$0xff]
    %v524 = vld [vmem:[#allocation2 + $0xc90] sm:$0xff]
    %v525 = vld [vmem:[#allocation2 + $0xc98] sm:$0xff]
    %v526 = vld [vmem:[#allocation2 + $0xca0] sm:$0xff]
    %v527 = vld [vmem:[#allocation2 + $0xca8] sm:$0xff]
    %v528 = vld [vmem:[#allocation2 + $0xcb0] sm:$0xff]
    %v529 = vld [vmem:[#allocation2 + $0xcb8] sm:$0xff]
    %v530 = vld [vmem:[#allocation2 + $0xcc0] sm:$0xff]
    %v531 = vld [vmem:[#allocation2 + $0xcc8] sm:$0xff]
    %v532 = vld [vmem:[#allocation2 + $0xcd0] sm:$0xff]
    %v533 = vld [vmem:[#allocation2 + $0xcd8] sm:$0xff]
    %v534 = vld [vmem:[#allocation2 + $0xce0] sm:$0xff]
    %v535 = vld [vmem:[#allocation2 + $0xce8] sm:$0xff]
    %v536 = vld [vmem:[#allocation2 + $0xcf0] sm:$0xff]
    %v537 = vld [vmem:[#allocation2 + $0xcf8] sm:$0xff]
    %v538 = vld [vmem:[#allocation2 + $0xd00] sm:$0xff]
    %v539 = vld [vmem:[#allocation2 + $0xd08] sm:$0xff]
    %v540 = vld [vmem:[#allocation2 + $0xd10] sm:$0xff]
    %v541 = vld [vmem:[#allocation2 + $0xd18] sm:$0xff]
    %v542 = vld [vmem:[#allocation2 + $0xd20] sm:$0xff]
    %v543 = vld [vmem:[#allocation2 + $0xd28] sm:$0xff]
    %v544 = vld [vmem:[#allocation2 + $0xd30] sm:$0xff]
    %v545 = vld [vmem:[#allocation2 + $0xd38] sm:$0xff]
    %v546 = vld [vmem:[#allocation2 + $0xd40] sm:$0xff]
    %v547 = vld [vmem:[#allocation2 + $0xd48] sm:$0xff]
    %v548 = vld [vmem:[#allocation2 + $0xd50] sm:$0xff]
    %v549 = vld [vmem:[#allocation2 + $0xd58] sm:$0xff]
    %v550 = vld [vmem:[#allocation2 + $0xd60] sm:$0xff]
    %v551 = vld [vmem:[#allocation2 + $0xd68] sm:$0xff]
    %v552 = vld [vmem:[#allocation2 + $0xd70] sm:$0xff]
    %v553 = vld [vmem:[#allocation2 + $0xd78] sm:$0xff]
    %v554 = vld [vmem:[#allocation2 + $0xd80] sm:$0xff]
    %v555 = vld [vmem:[#allocation2 + $0xd88] sm:$0xff]
    %v556 = vld [vmem:[#allocation2 + $0xd90] sm:$0xff]
    %v557 = vld [vmem:[#allocation2 + $0xd98] sm:$0xff]
    %v558 = vld [vmem:[#allocation2 + $0xda0] sm:$0xff]
    %v559 = vld [vmem:[#allocation2 + $0xda8] sm:$0xff]
    %v560 = vld [vmem:[#allocation2 + $0xdb0] sm:$0xff]
    %v561 = vld [vmem:[#allocation2 + $0xdb8] sm:$0xff]
    %v562 = vld [vmem:[#allocation2 + $0xdc0] sm:$0xff]
    %v563 = vld [vmem:[#allocation2 + $0xdc8] sm:$0xff]
    %v564 = vld [vmem:[#allocation2 + $0xdd0] sm:$0xff]
    %v565 = vld [vmem:[#allocation2 + $0xdd8] sm:$0xff]
    %v566 = vld [vmem:[#allocation2 + $0xde0] sm:$0xff]
    %v567 = vld [vmem:[#allocation2 + $0xde8] sm:$0xff]
    %v568 = vld [vmem:[#allocation2 + $0xdf0] sm:$0xff]
    %v569 = vld [vmem:[#allocation2 + $0xdf8] sm:$0xff]
    %v570 = vld [vmem:[#allocation2 + $0xe00] sm:$0xff]
    %v571 = vld [vmem:[#allocation2 + $0xe08] sm:$0xff]
    %v572 = vld [vmem:[#allocation2 + $0xe10] sm:$0xff]
    %v573 = vld [vmem:[#allocation2 + $0xe18] sm:$0xff]
    %v574 = vld [vmem:[#allocation2 + $0xe20] sm:$0xff]
    %v575 = vld [vmem:[#allocation2 + $0xe28] sm:$0xff]
    %v576 = vld [vmem:[#allocation2 + $0xe30] sm:$0xff]
    %v577 = vld [vmem:[#allocation2 + $0xe38] sm:$0xff]
    %v578 = vld [vmem:[#allocation2 + $0xe40] sm:$0xff]
    %v579 = vld [vmem:[#allocation2 + $0xe48] sm:$0xff]
    %v580 = vld [vmem:[#allocation2 + $0xe50] sm:$0xff]
    %v581 = vld [vmem:[#allocation2 + $0xe58] sm:$0xff]
    %v582 = vld [vmem:[#allocation2 + $0xe60] sm:$0xff]
    %v583 = vld [vmem:[#allocation2 + $0xe68] sm:$0xff]
    %v584 = vld [vmem:[#allocation2 + $0xe70] sm:$0xff]
    %v585 = vld [vmem:[#allocation2 + $0xe78] sm:$0xff]
    %v586 = vld [vmem:[#allocation2 + $0xe80] sm:$0xff]
    %v587 = vld [vmem:[#allocation2 + $0xe88] sm:$0xff]
    %v588 = vld [vmem:[#allocation2 + $0xe90] sm:$0xff]
    %v589 = vld [vmem:[#allocation2 + $0xe98] sm:$0xff]
    %v590 = vld [vmem:[#allocation2 + $0xea0] sm:$0xff]
    %v591 = vld [vmem:[#allocation2 + $0xea8] sm:$0xff]
    %v592 = vld [vmem:[#allocation2 + $0xeb0] sm:$0xff]
    %v593 = vld [vmem:[#allocation2 + $0xeb8] sm:$0xff]
    %v594 = vld [vmem:[#allocation2 + $0xec0] sm:$0xff]
    %v595 = vld [vmem:[#allocation2 + $0xec8] sm:$0xff]
    %v596 = vld [vmem:[#allocation2 + $0xed0] sm:$0xff]
    %v597 = vld [vmem:[#allocation2 + $0xed8] sm:$0xff]
    %v598 = vld [vmem:[#allocation2 + $0xee0] sm:$0xff]
    %v599 = vld [vmem:[#allocation2 + $0xee8] sm:$0xff]
    %v600 = vld [vmem:[#allocation2 + $0xef0] sm:$0xff]
    %v601 = vld [vmem:[#allocation2 + $0xef8] sm:$0xff]
    %v602 = vld [vmem:[#allocation2 + $0xf00] sm:$0xff]
    %v603 = vld [vmem:[#allocation2 + $0xf08] sm:$0xff]
    %v604 = vld [vmem:[#allocation2 + $0xf10] sm:$0xff]
    %v605 = vld [vmem:[#allocation2 + $0xf18] sm:$0xff]
    %v606 = vld [vmem:[#allocation2 + $0xf20] sm:$0xff]
    %v607 = vld [vmem:[#allocation2 + $0xf28] sm:$0xff]
    %v608 = vld [vmem:[#allocation2 + $0xf30] sm:$0xff]
    %v609 = vld [vmem:[#allocation2 + $0xf38] sm:$0xff]
    %v610 = vld [vmem:[#allocation2 + $0xf40] sm:$0xff]
    %v611 = vld [vmem:[#allocation2 + $0xf48] sm:$0xff]
    %v612 = vld [vmem:[#allocation2 + $0xf50] sm:$0xff]
    %v613 = vld [vmem:[#allocation2 + $0xf58] sm:$0xff]
    %v614 = vld [vmem:[#allocation2 + $0xf60] sm:$0xff]
    %v615 = vld [vmem:[#allocation2 + $0xf68] sm:$0xff]
    %v616 = vld [vmem:[#allocation2 + $0xf70] sm:$0xff]
    %v617 = vld [vmem:[#allocation2 + $0xf78] sm:$0xff]
    %v618 = vld [vmem:[#allocation2 + $0xf80] sm:$0xff]
    %v619 = vld [vmem:[#allocation2 + $0xf88] sm:$0xff]
    %v620 = vld [vmem:[#allocation2 + $0xf90] sm:$0xff]
    %v621 = vld [vmem:[#allocation2 + $0xf98] sm:$0xff]
    %v622 = vld [vmem:[#allocation2 + $0xfa0] sm:$0xff]
    %v623 = vld [vmem:[#allocation2 + $0xfa8] sm:$0xff]
    %v624 = vld [vmem:[#allocation2 + $0xfb0] sm:$0xff]
    %v625 = vld [vmem:[#allocation2 + $0xfb8] sm:$0xff]
    %v626 = vld [vmem:[#allocation2 + $0xfc0] sm:$0xff]
    %v627 = vld [vmem:[#allocation2 + $0xfc8] sm:$0xff]
    %v628 = vld [vmem:[#allocation2 + $0xfd0] sm:$0xff]
    %v629 = vld [vmem:[#allocation2 + $0xfd8] sm:$0xff]
    %v630 = vld [vmem:[#allocation2 + $0xfe0] sm:$0xff]
    %v631 = vld [vmem:[#allocation2 + $0xfe8] sm:$0xff]
    %v632 = vld [vmem:[#allocation2 + $0xff0] sm:$0xff]
    %v633 = vld [vmem:[#allocation2 + $0xff8] sm:$0xff]
    %v634 = vld [vmem:[#allocation2 + $0x1000] sm:$0xff]
    %v635 = vld [vmem:[#allocation2 + $0x1008] sm:$0xff]
    %v636 = vld [vmem:[#allocation2 + $0x1010] sm:$0xff]
    %v637 = vld [vmem:[#allocation2 + $0x1018] sm:$0xff]
    %v638 = vld [vmem:[#allocation2 + $0x1020] sm:$0xff]
    %v639 = vld [vmem:[#allocation2 + $0x1028] sm:$0xff]
    %v640 = vld [vmem:[#allocation2 + $0x1030] sm:$0xff]
    %v641 = vld [vmem:[#allocation2 + $0x1038] sm:$0xff]
    %v642 = vld [vmem:[#allocation2 + $0x1040] sm:$0xff]
    %v643 = vld [vmem:[#allocation2 + $0x1048] sm:$0xff]
    %v644 = vld [vmem:[#allocation2 + $0x1050] sm:$0xff]
    %v645 = vld [vmem:[#allocation2 + $0x1058] sm:$0xff]
    %v646 = vld [vmem:[#allocation2 + $0x1060] sm:$0xff]
    %v647 = vld [vmem:[#allocation2 + $0x1068] sm:$0xff]
    %v648 = vld [vmem:[#allocation2 + $0x1070] sm:$0xff]
    %v649 = vld [vmem:[#allocation2 + $0x1078] sm:$0xff]
    %v650 = vld [vmem:[#allocation2 + $0x1080] sm:$0xff]
    %v651 = vld [vmem:[#allocation2 + $0x1088] sm:$0xff]
    %v652 = vld [vmem:[#allocation2 + $0x1090] sm:$0xff]
    %v653 = vld [vmem:[#allocation2 + $0x1098] sm:$0xff]
    %v654 = vld [vmem:[#allocation2 + $0x10a0] sm:$0xff]
    %v655 = vld [vmem:[#allocation2 + $0x10a8] sm:$0xff]
    %v656 = vld [vmem:[#allocation2 + $0x10b0] sm:$0xff]
    %v657 = vld [vmem:[#allocation2 + $0x10b8] sm:$0xff]
    %v658 = vld [vmem:[#allocation2 + $0x10c0] sm:$0xff]
    %v659 = vld [vmem:[#allocation2 + $0x10c8] sm:$0xff]
    %v660 = vld [vmem:[#allocation2 + $0x10d0] sm:$0xff]
    %v661 = vld [vmem:[#allocation2 + $0x10d8] sm:$0xff]
    %v662 = vld [vmem:[#allocation2 + $0x10e0] sm:$0xff]
    %v663 = vld [vmem:[#allocation2 + $0x10e8] sm:$0xff]
    %v664 = vld [vmem:[#allocation2 + $0x10f0] sm:$0xff]
    %v665 = vld [vmem:[#allocation2 + $0x10f8] sm:$0xff]
    %v666 = vld [vmem:[#allocation2 + $0x1100] sm:$0xff]
    %v667 = vld [vmem:[#allocation2 + $0x1108] sm:$0xff]
    %v668 = vld [vmem:[#allocation2 + $0x1110] sm:$0xff]
    %v669 = vld [vmem:[#allocation2 + $0x1118] sm:$0xff]
    %v670 = vld [vmem:[#allocation2 + $0x1120] sm:$0xff]
    %v671 = vld [vmem:[#allocation2 + $0x1128] sm:$0xff]
    %v672 = vld [vmem:[#allocation2 + $0x1130] sm:$0xff]
    %v673 = vld [vmem:[#allocation2 + $0x1138] sm:$0xff]
    %v674 = vld [vmem:[#allocation2 + $0x1140] sm:$0xff]
    %v675 = vld [vmem:[#allocation2 + $0x1148] sm:$0xff]
    %v676 = vld [vmem:[#allocation2 + $0x1150] sm:$0xff]
    %v677 = vld [vmem:[#allocation2 + $0x1158] sm:$0xff]
    %v678 = vld [vmem:[#allocation2 + $0x1160] sm:$0xff]
    %v679 = vld [vmem:[#allocation2 + $0x1168] sm:$0xff]
    %v680 = vld [vmem:[#allocation2 + $0x1170] sm:$0xff]
    %v681 = vld [vmem:[#allocation2 + $0x1178] sm:$0xff]
    %v682 = vld [vmem:[#allocation2 + $0x1180] sm:$0xff]
    %v683 = vld [vmem:[#allocation2 + $0x1188] sm:$0xff]
    %v684 = vld [vmem:[#allocation2 + $0x1190] sm:$0xff]
    %v685 = vld [vmem:[#allocation2 + $0x1198] sm:$0xff]
    %v686 = vld [vmem:[#allocation2 + $0x11a0] sm:$0xff]
    %v687 = vld [vmem:[#allocation2 + $0x11a8] sm:$0xff]
    %v688 = vld [vmem:[#allocation2 + $0x11b0] sm:$0xff]
    %v689 = vld [vmem:[#allocation2 + $0x11b8] sm:$0xff]
    %v690 = vld [vmem:[#allocation2 + $0x11c0] sm:$0xff]
    %v691 = vld [vmem:[#allocation2 + $0x11c8] sm:$0xff]
    %v692 = vld [vmem:[#allocation2 + $0x11d0] sm:$0xff]
    %v693 = vld [vmem:[#allocation2 + $0x11d8] sm:$0xff]
    %v694 = vld [vmem:[#allocation2 + $0x11e0] sm:$0xff]
    %v695 = vld [vmem:[#allocation2 + $0x11e8] sm:$0xff]
    %v696 = vld [vmem:[#allocation2 + $0x11f0] sm:$0xff]
    %v697 = vld [vmem:[#allocation2 + $0x11f8] sm:$0xff]
    %v698 = vld [vmem:[#allocation2 + $0x1200] sm:$0xff]
    %v699 = vld [vmem:[#allocation2 + $0x1208] sm:$0xff]
    %v700 = vld [vmem:[#allocation2 + $0x1210] sm:$0xff]
    %v701 = vld [vmem:[#allocation2 + $0x1218] sm:$0xff]
    %v702 = vld [vmem:[#allocation2 + $0x1220] sm:$0xff]
    %v703 = vld [vmem:[#allocation2 + $0x1228] sm:$0xff]
    %v704 = vld [vmem:[#allocation2 + $0x1230] sm:$0xff]
    %v705 = vld [vmem:[#allocation2 + $0x1238] sm:$0xff]
    %v706 = vld [vmem:[#allocation2 + $0x1240] sm:$0xff]
    %v707 = vld [vmem:[#allocation2 + $0x1248] sm:$0xff]
    %v708 = vld [vmem:[#allocation2 + $0x1250] sm:$0xff]
    %v709 = vld [vmem:[#allocation2 + $0x1258] sm:$0xff]
    %v710 = vld [vmem:[#allocation2 + $0x1260] sm:$0xff]
    %v711 = vld [vmem:[#allocation2 + $0x1268] sm:$0xff]
    %v712 = vld [vmem:[#allocation2 + $0x1270] sm:$0xff]
    %v713 = vld [vmem:[#allocation2 + $0x1278] sm:$0xff]
    %v714 = vld [vmem:[#allocation2 + $0x1280] sm:$0xff]
    %v715 = vld [vmem:[#allocation2 + $0x1288] sm:$0xff]
    %v716 = vld [vmem:[#allocation2 + $0x1290] sm:$0xff]
    %v717 = vld [vmem:[#allocation2 + $0x1298] sm:$0xff]
    %v718 = vld [vmem:[#allocation2 + $0x12a0] sm:$0xff]
    %v719 = vld [vmem:[#allocation2 + $0x12a8] sm:$0xff]
    %v720 = vld [vmem:[#allocation2 + $0x12b0] sm:$0xff]
    %v721 = vld [vmem:[#allocation2 + $0x12b8] sm:$0xff]
    %v722 = vld [vmem:[#allocation2 + $0x12c0] sm:$0xff]
    %v723 = vld [vmem:[#allocation2 + $0x12c8] sm:$0xff]
    %v724 = vld [vmem:[#allocation2 + $0x12d0] sm:$0xff]
    %v725 = vld [vmem:[#allocation2 + $0x12d8] sm:$0xff]
    %v726 = vld [vmem:[#allocation2 + $0x12e0] sm:$0xff]
    %v727 = vld [vmem:[#allocation2 + $0x12e8] sm:$0xff]
    %v728 = vld [vmem:[#allocation2 + $0x12f0] sm:$0xff]
    %v729 = vld [vmem:[#allocation2 + $0x12f8] sm:$0xff]
    %v730 = vld [vmem:[#allocation2 + $0x1300] sm:$0xff]
    %v731 = vld [vmem:[#allocation2 + $0x1308] sm:$0xff]
    %v732 = vld [vmem:[#allocation2 + $0x1310] sm:$0xff]
    %v733 = vld [vmem:[#allocation2 + $0x1318] sm:$0xff]
    %v734 = vld [vmem:[#allocation2 + $0x1320] sm:$0xff]
    %v735 = vld [vmem:[#allocation2 + $0x1328] sm:$0xff]
    %v736 = vld [vmem:[#allocation2 + $0x1330] sm:$0xff]
    %v737 = vld [vmem:[#allocation2 + $0x1338] sm:$0xff]
    %v738 = vld [vmem:[#allocation2 + $0x1340] sm:$0xff]
    %v739 = vld [vmem:[#allocation2 + $0x1348] sm:$0xff]
    %v740 = vld [vmem:[#allocation2 + $0x1350] sm:$0xff]
    %v741 = vld [vmem:[#allocation2 + $0x1358] sm:$0xff]
    %v742 = vld [vmem:[#allocation2 + $0x1360] sm:$0xff]
    %v743 = vld [vmem:[#allocation2 + $0x1368] sm:$0xff]
    %v744 = vld [vmem:[#allocation2 + $0x1370] sm:$0xff]
    %v745 = vld [vmem:[#allocation2 + $0x1378] sm:$0xff]
    %v746 = vld [vmem:[#allocation2 + $0x1380] sm:$0xff]
    %v747 = vld [vmem:[#allocation2 + $0x1388] sm:$0xff]
    %v748 = vld [vmem:[#allocation2 + $0x1390] sm:$0xff]
    %v749 = vld [vmem:[#allocation2 + $0x1398] sm:$0xff]
    %v750 = vld [vmem:[#allocation2 + $0x13a0] sm:$0xff]
    %v751 = vld [vmem:[#allocation2 + $0x13a8] sm:$0xff]
    %v752 = vld [vmem:[#allocation2 + $0x13b0] sm:$0xff]
    %v753 = vld [vmem:[#allocation2 + $0x13b8] sm:$0xff]
    %v754 = vld [vmem:[#allocation2 + $0x13c0] sm:$0xff]
    %v755 = vld [vmem:[#allocation2 + $0x13c8] sm:$0xff]
    %v756 = vld [vmem:[#allocation2 + $0x13d0] sm:$0xff]
    %v757 = vld [vmem:[#allocation2 + $0x13d8] sm:$0xff]
    %v758 = vld [vmem:[#allocation2 + $0x13e0] sm:$0xff]
    %v759 = vld [vmem:[#allocation2 + $0x13e8] sm:$0xff]
    %v760 = vld [vmem:[#allocation2 + $0x13f0] sm:$0xff]
    %v761 = vld [vmem:[#allocation2 + $0x13f8] sm:$0xff]
    %v762 = vld [vmem:[#allocation2 + $0x1400] sm:$0xff]
    %v763 = vld [vmem:[#allocation2 + $0x1408] sm:$0xff]
    %v764 = vld [vmem:[#allocation2 + $0x1410] sm:$0xff]
    %v765 = vld [vmem:[#allocation2 + $0x1418] sm:$0xff]
    %v766 = vld [vmem:[#allocation2 + $0x1420] sm:$0xff]
    %v767 = vld [vmem:[#allocation2 + $0x1428] sm:$0xff]
    %v768 = vld [vmem:[#allocation2 + $0x1430] sm:$0xff]
    %v769 = vld [vmem:[#allocation2 + $0x1438] sm:$0xff]
    %v770 = vld [vmem:[#allocation2 + $0x1440] sm:$0xff]
    %v771 = vld [vmem:[#allocation2 + $0x1448] sm:$0xff]
    %v772 = vld [vmem:[#allocation2 + $0x1450] sm:$0xff]
    %v773 = vld [vmem:[#allocation2 + $0x1458] sm:$0xff]
    %v774 = vld [vmem:[#allocation2 + $0x1460] sm:$0xff]
    %v775 = vld [vmem:[#allocation2 + $0x1468] sm:$0xff]
    %v776 = vld [vmem:[#allocation2 + $0x1470] sm:$0xff]
    %v777 = vld [vmem:[#allocation2 + $0x1478] sm:$0xff]
    %v778 = vld [vmem:[#allocation2 + $0x1480] sm:$0xff]
    %v779 = vld [vmem:[#allocation2 + $0x1488] sm:$0xff]
    %v780 = vld [vmem:[#allocation2 + $0x1490] sm:$0xff]
    %v781 = vld [vmem:[#allocation2 + $0x1498] sm:$0xff]
    %v782 = vld [vmem:[#allocation2 + $0x14a0] sm:$0xff]
    %v783 = vld [vmem:[#allocation2 + $0x14a8] sm:$0xff]
    %v784 = vld [vmem:[#allocation2 + $0x14b0] sm:$0xff]
    %v785 = vld [vmem:[#allocation2 + $0x14b8] sm:$0xff]
    %v786 = vld [vmem:[#allocation2 + $0x14c0] sm:$0xff]
    %v787 = vld [vmem:[#allocation2 + $0x14c8] sm:$0xff]
    %v788 = vld [vmem:[#allocation2 + $0x14d0] sm:$0xff]
    %v789 = vld [vmem:[#allocation2 + $0x14d8] sm:$0xff]
    %v790 = vld [vmem:[#allocation2 + $0x14e0] sm:$0xff]
    %v791 = vld [vmem:[#allocation2 + $0x14e8] sm:$0xff]
    %v792 = vld [vmem:[#allocation2 + $0x14f0] sm:$0xff]
    %v793 = vld [vmem:[#allocation2 + $0x14f8] sm:$0xff]
    %v794 = vld [vmem:[#allocation2 + $0x1500] sm:$0xff]
    %v795 = vld [vmem:[#allocation2 + $0x1508] sm:$0xff]
    %v796 = vld [vmem:[#allocation2 + $0x1510] sm:$0xff]
    %v797 = vld [vmem:[#allocation2 + $0x1518] sm:$0xff]
    %v798 = vld [vmem:[#allocation2 + $0x1520] sm:$0xff]
    %v799 = vld [vmem:[#allocation2 + $0x1528] sm:$0xff]
    %v800 = vld [vmem:[#allocation2 + $0x1530] sm:$0xff]
    %v801 = vld [vmem:[#allocation2 + $0x1538] sm:$0xff]
    %v802 = vld [vmem:[#allocation2 + $0x1540] sm:$0xff]
    %v803 = vld [vmem:[#allocation2 + $0x1548] sm:$0xff]
    %v804 = vld [vmem:[#allocation2 + $0x1550] sm:$0xff]
    %v805 = vld [vmem:[#allocation2 + $0x1558] sm:$0xff]
    %v806 = vld [vmem:[#allocation2 + $0x1560] sm:$0xff]
    %v807 = vld [vmem:[#allocation2 + $0x1568] sm:$0xff]
    %v808 = vld [vmem:[#allocation2 + $0x1570] sm:$0xff]
    %v809 = vld [vmem:[#allocation2 + $0x1578] sm:$0xff]
    %v810 = vld [vmem:[#allocation2 + $0x1580] sm:$0xff]
    %v811 = vld [vmem:[#allocation2 + $0x1588] sm:$0xff]
    %v812 = vld [vmem:[#allocation2 + $0x1590] sm:$0xff]
    %v813 = vld [vmem:[#allocation2 + $0x1598] sm:$0xff]
    %v814 = vld [vmem:[#allocation2 + $0x15a0] sm:$0xff]
    %v815 = vld [vmem:[#allocation2 + $0x15a8] sm:$0xff]
    %v816 = vld [vmem:[#allocation2 + $0x15b0] sm:$0xff]
    %v817 = vld [vmem:[#allocation2 + $0x15b8] sm:$0xff]
    %v818 = vld [vmem:[#allocation2 + $0x15c0] sm:$0xff]
    %v819 = vld [vmem:[#allocation2 + $0x15c8] sm:$0xff]
    %v820 = vld [vmem:[#allocation2 + $0x15d0] sm:$0xff]
    %v821 = vld [vmem:[#allocation2 + $0x15d8] sm:$0xff]
    %v822 = vld [vmem:[#allocation2 + $0x15e0] sm:$0xff]
    %v823 = vld [vmem:[#allocation2 + $0x15e8] sm:$0xff]
    %v824 = vld [vmem:[#allocation2 + $0x15f0] sm:$0xff]
    %v825 = vld [vmem:[#allocation2 + $0x15f8] sm:$0xff]
    %v826 = vld [vmem:[#allocation2 + $0x1600] sm:$0xff]
    %v827 = vld [vmem:[#allocation2 + $0x1608] sm:$0xff]
    %v828 = vld [vmem:[#allocation2 + $0x1610] sm:$0xff]
    %v829 = vld [vmem:[#allocation2 + $0x1618] sm:$0xff]
    %v830 = vld [vmem:[#allocation2 + $0x1620] sm:$0xff]
    %v831 = vld [vmem:[#allocation2 + $0x1628] sm:$0xff]
    %v832 = vld [vmem:[#allocation2 + $0x1630] sm:$0xff]
    %v833 = vld [vmem:[#allocation2 + $0x1638] sm:$0xff]
    %v834 = vld [vmem:[#allocation2 + $0x1640] sm:$0xff]
    %v835 = vld [vmem:[#allocation2 + $0x1648] sm:$0xff]
    %v836 = vld [vmem:[#allocation2 + $0x1650] sm:$0xff]
    %v837 = vld [vmem:[#allocation2 + $0x1658] sm:$0xff]
    %v838 = vld [vmem:[#allocation2 + $0x1660] sm:$0xff]
    %v839 = vld [vmem:[#allocation2 + $0x1668] sm:$0xff]
    %v840 = vld [vmem:[#allocation2 + $0x1670] sm:$0xff]
    %v841 = vld [vmem:[#allocation2 + $0x1678] sm:$0xff]
    %v842 = vld [vmem:[#allocation2 + $0x1680] sm:$0xff]
    %v843 = vld [vmem:[#allocation2 + $0x1688] sm:$0xff]
    %v844 = vld [vmem:[#allocation2 + $0x1690] sm:$0xff]
    %v845 = vld [vmem:[#allocation2 + $0x1698] sm:$0xff]
    %v846 = vld [vmem:[#allocation2 + $0x16a0] sm:$0xff]
    %v847 = vld [vmem:[#allocation2 + $0x16a8] sm:$0xff]
    %v848 = vld [vmem:[#allocation2 + $0x16b0] sm:$0xff]
    %v849 = vld [vmem:[#allocation2 + $0x16b8] sm:$0xff]
    %v850 = vld [vmem:[#allocation2 + $0x16c0] sm:$0xff]
    %v851 = vld [vmem:[#allocation2 + $0x16c8] sm:$0xff]
    %v852 = vld [vmem:[#allocation2 + $0x16d0] sm:$0xff]
    %v853 = vld [vmem:[#allocation2 + $0x16d8] sm:$0xff]
    %v854 = vld [vmem:[#allocation2 + $0x16e0] sm:$0xff]
    %v855 = vld [vmem:[#allocation2 + $0x16e8] sm:$0xff]
    %v856 = vld [vmem:[#allocation2 + $0x16f0] sm:$0xff]
    %v857 = vld [vmem:[#allocation2 + $0x16f8] sm:$0xff]
    %v858 = vld [vmem:[#allocation2 + $0x1700] sm:$0xff]
    %v859 = vld [vmem:[#allocation2 + $0x1708] sm:$0xff]
    %v860 = vld [vmem:[#allocation2 + $0x1710] sm:$0xff]
    %v861 = vld [vmem:[#allocation2 + $0x1718] sm:$0xff]
    %v862 = vld [vmem:[#allocation2 + $0x1720] sm:$0xff]
    %v863 = vld [vmem:[#allocation2 + $0x1728] sm:$0xff]
    %v864 = vld [vmem:[#allocation2 + $0x1730] sm:$0xff]
    %v865 = vld [vmem:[#allocation2 + $0x1738] sm:$0xff]
    %v866 = vld [vmem:[#allocation2 + $0x1740] sm:$0xff]
    %v867 = vld [vmem:[#allocation2 + $0x1748] sm:$0xff]
    %v868 = vld [vmem:[#allocation2 + $0x1750] sm:$0xff]
    %v869 = vld [vmem:[#allocation2 + $0x1758] sm:$0xff]
    %v870 = vld [vmem:[#allocation2 + $0x1760] sm:$0xff]
    %v871 = vld [vmem:[#allocation2 + $0x1768] sm:$0xff]
    %v872 = vld [vmem:[#allocation2 + $0x1770] sm:$0xff]
    %v873 = vld [vmem:[#allocation2 + $0x1778] sm:$0xff]
    %v874 = vld [vmem:[#allocation2 + $0x1780] sm:$0xff]
    %v875 = vld [vmem:[#allocation2 + $0x1788] sm:$0xff]
    %v876 = vld [vmem:[#allocation2 + $0x1790] sm:$0xff]
    %v877 = vld [vmem:[#allocation2 + $0x1798] sm:$0xff]
    %v878 = vld [vmem:[#allocation2 + $0x17a0] sm:$0xff]
    %v879 = vld [vmem:[#allocation2 + $0x17a8] sm:$0xff]
    %v880 = vld [vmem:[#allocation2 + $0x17b0] sm:$0xff]
    %v881 = vld [vmem:[#allocation2 + $0x17b8] sm:$0xff]
    %v882 = vld [vmem:[#allocation2 + $0x17c0] sm:$0xff]
    %v883 = vld [vmem:[#allocation2 + $0x17c8] sm:$0xff]
    %v884 = vld [vmem:[#allocation2 + $0x17d0] sm:$0xff]
    %v885 = vld [vmem:[#allocation2 + $0x17d8] sm:$0xff]
    %v886 = vld [vmem:[#allocation2 + $0x17e0] sm:$0xff]
    %v887 = vld [vmem:[#allocation2 + $0x17e8] sm:$0xff]
    %v888 = vld [vmem:[#allocation2 + $0x17f0] sm:$0xff]
    %v889 = vld [vmem:[#allocation2 + $0x17f8] sm:$0xff]
    %v890 = vld [vmem:[#allocation2 + $0x1800] sm:$0xff]
    %v891 = vld [vmem:[#allocation2 + $0x1808] sm:$0xff]
    %v892 = vld [vmem:[#allocation2 + $0x1810] sm:$0xff]
    %v893 = vld [vmem:[#allocation2 + $0x1818] sm:$0xff]
    %v894 = vld [vmem:[#allocation2 + $0x1820] sm:$0xff]
    %v895 = vld [vmem:[#allocation2 + $0x1828] sm:$0xff]
    %v896 = vld [vmem:[#allocation2 + $0x1830] sm:$0xff]
    %v897 = vld [vmem:[#allocation2 + $0x1838] sm:$0xff]
    %v898 = vld [vmem:[#allocation2 + $0x1840] sm:$0xff]
    %v899 = vld [vmem:[#allocation2 + $0x1848] sm:$0xff]
    %v900 = vld [vmem:[#allocation2 + $0x1850] sm:$0xff]
    %v901 = vld [vmem:[#allocation2 + $0x1858] sm:$0xff]
    %v902 = vld [vmem:[#allocation2 + $0x1860] sm:$0xff]
    %v903 = vld [vmem:[#allocation2 + $0x1868] sm:$0xff]
    %v904 = vld [vmem:[#allocation2 + $0x1870] sm:$0xff]
    %v905 = vld [vmem:[#allocation2 + $0x1878] sm:$0xff]
    %v906 = vld [vmem:[#allocation2 + $0x1880] sm:$0xff]
    %v907 = vld [vmem:[#allocation2 + $0x1888] sm:$0xff]
    %v908 = vld [vmem:[#allocation2 + $0x1890] sm:$0xff]
    %v909 = vld [vmem:[#allocation2 + $0x1898] sm:$0xff]
    %v910 = vld [vmem:[#allocation2 + $0x18a0] sm:$0xff]
    %v911 = vld [vmem:[#allocation2 + $0x18a8] sm:$0xff]
    %v912 = vld [vmem:[#allocation2 + $0x18b0] sm:$0xff]
    %v913 = vld [vmem:[#allocation2 + $0x18b8] sm:$0xff]
    %v914 = vld [vmem:[#allocation2 + $0x18c0] sm:$0xff]
    %v915 = vld [vmem:[#allocation2 + $0x18c8] sm:$0xff]
    %v916 = vld [vmem:[#allocation2 + $0x18d0] sm:$0xff]
    %v917 = vld [vmem:[#allocation2 + $0x18d8] sm:$0xff]
    %v918 = vld [vmem:[#allocation2 + $0x18e0] sm:$0xff]
    %v919 = vld [vmem:[#allocation2 + $0x18e8] sm:$0xff]
    %v920 = vld [vmem:[#allocation2 + $0x18f0] sm:$0xff]
    %v921 = vld [vmem:[#allocation2 + $0x18f8] sm:$0xff]
    %v922 = vld [vmem:[#allocation2 + $0x1900] sm:$0xff]
    %v923 = vld [vmem:[#allocation2 + $0x1908] sm:$0xff]
    %v924 = vld [vmem:[#allocation2 + $0x1910] sm:$0xff]
    %v925 = vld [vmem:[#allocation2 + $0x1918] sm:$0xff]
    %v926 = vld [vmem:[#allocation2 + $0x1920] sm:$0xff]
    %v927 = vld [vmem:[#allocation2 + $0x1928] sm:$0xff]
    %v928 = vld [vmem:[#allocation2 + $0x1930] sm:$0xff]
    %v929 = vld [vmem:[#allocation2 + $0x1938] sm:$0xff]
    %v930 = vld [vmem:[#allocation2 + $0x1940] sm:$0xff]
    %v931 = vld [vmem:[#allocation2 + $0x1948] sm:$0xff]
    %v932 = vld [vmem:[#allocation2 + $0x1950] sm:$0xff]
    %v933 = vld [vmem:[#allocation2 + $0x1958] sm:$0xff]
    %v934 = vld [vmem:[#allocation2 + $0x1960] sm:$0xff]
    %v935 = vld [vmem:[#allocation2 + $0x1968] sm:$0xff]
    %v936 = vld [vmem:[#allocation2 + $0x1970] sm:$0xff]
    %v937 = vld [vmem:[#allocation2 + $0x1978] sm:$0xff]
    %v938 = vld [vmem:[#allocation2 + $0x1980] sm:$0xff]
    %v939 = vld [vmem:[#allocation2 + $0x1988] sm:$0xff]
    %v940 = vld [vmem:[#allocation2 + $0x1990] sm:$0xff]
    %v941 = vld [vmem:[#allocation2 + $0x1998] sm:$0xff]
    %v942 = vld [vmem:[#allocation2 + $0x19a0] sm:$0xff]
    %v943 = vld [vmem:[#allocation2 + $0x19a8] sm:$0xff]
    %v944 = vld [vmem:[#allocation2 + $0x19b0] sm:$0xff]
    %v945 = vld [vmem:[#allocation2 + $0x19b8] sm:$0xff]
    %v946 = vld [vmem:[#allocation2 + $0x19c0] sm:$0xff]
    %v947 = vld [vmem:[#allocation2 + $0x19c8] sm:$0xff]
    %v948 = vld [vmem:[#allocation2 + $0x19d0] sm:$0xff]
    %v949 = vld [vmem:[#allocation2 + $0x19d8] sm:$0xff]
    %v950 = vld [vmem:[#allocation2 + $0x19e0] sm:$0xff]
    %v951 = vld [vmem:[#allocation2 + $0x19e8] sm:$0xff]
    %v952 = vld [vmem:[#allocation2 + $0x19f0] sm:$0xff]
    %v953 = vld [vmem:[#allocation2 + $0x19f8] sm:$0xff]
    %v954 = vld [vmem:[#allocation2 + $0x1a00] sm:$0xff]
    %v955 = vld [vmem:[#allocation2 + $0x1a08] sm:$0xff]
    %v956 = vld [vmem:[#allocation2 + $0x1a10] sm:$0xff]
    %v957 = vld [vmem:[#allocation2 + $0x1a18] sm:$0xff]
    %v958 = vld [vmem:[#allocation2 + $0x1a20] sm:$0xff]
    %v959 = vld [vmem:[#allocation2 + $0x1a28] sm:$0xff]
    %v960 = vld [vmem:[#allocation2 + $0x1a30] sm:$0xff]
    %v961 = vld [vmem:[#allocation2 + $0x1a38] sm:$0xff]
    %v962 = vld [vmem:[#allocation2 + $0x1a40] sm:$0xff]
    %v963 = vld [vmem:[#allocation2 + $0x1a48] sm:$0xff]
    %v964 = vld [vmem:[#allocation2 + $0x1a50] sm:$0xff]
    %v965 = vld [vmem:[#allocation2 + $0x1a58] sm:$0xff]
    %v966 = vld [vmem:[#allocation2 + $0x1a60] sm:$0xff]
    %v967 = vld [vmem:[#allocation2 + $0x1a68] sm:$0xff]
    %v968 = vld [vmem:[#allocation2 + $0x1a70] sm:$0xff]
    %v969 = vld [vmem:[#allocation2 + $0x1a78] sm:$0xff]
    %v970 = vld [vmem:[#allocation2 + $0x1a80] sm:$0xff]
    %v971 = vld [vmem:[#allocation2 + $0x1a88] sm:$0xff]
    %v972 = vld [vmem:[#allocation2 + $0x1a90] sm:$0xff]
    %v973 = vld [vmem:[#allocation2 + $0x1a98] sm:$0xff]
    %v974 = vld [vmem:[#allocation2 + $0x1aa0] sm:$0xff]
    %v975 = vld [vmem:[#allocation2 + $0x1aa8] sm:$0xff]
    %v976 = vld [vmem:[#allocation2 + $0x1ab0] sm:$0xff]
    %v977 = vld [vmem:[#allocation2 + $0x1ab8] sm:$0xff]
    %v978 = vld [vmem:[#allocation2 + $0x1ac0] sm:$0xff]
    %v979 = vld [vmem:[#allocation2 + $0x1ac8] sm:$0xff]
    %v980 = vld [vmem:[#allocation2 + $0x1ad0] sm:$0xff]
    %v981 = vld [vmem:[#allocation2 + $0x1ad8] sm:$0xff]
    %v982 = vld [vmem:[#allocation2 + $0x1ae0] sm:$0xff]
    %v983 = vld [vmem:[#allocation2 + $0x1ae8] sm:$0xff]
    %v984 = vld [vmem:[#allocation2 + $0x1af0] sm:$0xff]
    %v985 = vld [vmem:[#allocation2 + $0x1af8] sm:$0xff]
    %v986 = vld [vmem:[#allocation2 + $0x1b00] sm:$0xff]
    %v987 = vld [vmem:[#allocation2 + $0x1b08] sm:$0xff]
    %v988 = vld [vmem:[#allocation2 + $0x1b10] sm:$0xff]
    %v989 = vld [vmem:[#allocation2 + $0x1b18] sm:$0xff]
    %v990 = vld [vmem:[#allocation2 + $0x1b20] sm:$0xff]
    %v991 = vld [vmem:[#allocation2 + $0x1b28] sm:$0xff]
    %v992 = vld [vmem:[#allocation2 + $0x1b30] sm:$0xff]
    %v993 = vld [vmem:[#allocation2 + $0x1b38] sm:$0xff]
    %v994 = vld [vmem:[#allocation2 + $0x1b40] sm:$0xff]
    %v995 = vld [vmem:[#allocation2 + $0x1b48] sm:$0xff]
    %v996 = vld [vmem:[#allocation2 + $0x1b50] sm:$0xff]
    %v997 = vld [vmem:[#allocation2 + $0x1b58] sm:$0xff]
    %v998 = vld [vmem:[#allocation2 + $0x1b60] sm:$0xff]
    %v999 = vld [vmem:[#allocation2 + $0x1b68] sm:$0xff]
    %v1000 = vld [vmem:[#allocation2 + $0x1b70] sm:$0xff]
    %v1001 = vld [vmem:[#allocation2 + $0x1b78] sm:$0xff]
    %v1002 = vld [vmem:[#allocation2 + $0x1b80] sm:$0xff]
    %v1003 = vld [vmem:[#allocation2 + $0x1b88] sm:$0xff]
    %v1004 = vld [vmem:[#allocation2 + $0x1b90] sm:$0xff]
    %v1005 = vld [vmem:[#allocation2 + $0x1b98] sm:$0xff]
    %v1006 = vld [vmem:[#allocation2 + $0x1ba0] sm:$0xff]
    %v1007 = vld [vmem:[#allocation2 + $0x1ba8] sm:$0xff]
    %v1008 = vld [vmem:[#allocation2 + $0x1bb0] sm:$0xff]
    %v1009 = vld [vmem:[#allocation2 + $0x1bb8] sm:$0xff]
    %v1010 = vld [vmem:[#allocation2 + $0x1bc0] sm:$0xff]
    %v1011 = vld [vmem:[#allocation2 + $0x1bc8] sm:$0xff]
    %v1012 = vld [vmem:[#allocation2 + $0x1bd0] sm:$0xff]
    %v1013 = vld [vmem:[#allocation2 + $0x1bd8] sm:$0xff]
    %v1014 = vld [vmem:[#allocation2 + $0x1be0] sm:$0xff]
    %v1015 = vld [vmem:[#allocation2 + $0x1be8] sm:$0xff]
    %v1016 = vld [vmem:[#allocation2 + $0x1bf0] sm:$0xff]
    %v1017 = vld [vmem:[#allocation2 + $0x1bf8] sm:$0xff]
    %v1018 = vld [vmem:[#allocation4] sm:$0x7f]
    %v1020 = vperm.slane %v1018, 0
    %v1021 = vperm.slane %v1018, 1
    %v1022 = vperm.slane %v1018, 2
    %v1023 = vperm.slane %v1018, 3
    %v1024 = vperm.slane %v1018, 4
    %v1025 = vperm.slane %v1018, 5
    %v1026 = vperm.slane %v1018, 6
    %1034 = vmatpush.msra.mxu0 %v227
    %1035 = vmatpush.msra.mxu0 %v220
    %1036 = vmatpush.msra.mxu0 %v213
    %1037 = vmatpush.msra.mxu0 %v206
    %1038 = vmatpush.msra.mxu0 %v199
    %1039 = vmatpush.msra.mxu0 %v192
    %1040 = vmatpush.msra.mxu0 %v185
    %1041 = vmatpush.msra.mxu0 %v178
    %1042 = vmatpush.msra.mxu0 %v171
    %1043 = vmatpush.msra.mxu0 %v164
    %1044 = vmatpush.msra.mxu0 %v157
    %1045 = vmatpush.msra.mxu0 %v150
    %1046 = vmatpush.msra.mxu0 %v143
    %1047 = vmatpush.msra.mxu0 %v136
    %1048 = vmatpush.msra.mxu0 %v129
    %1049 = vmatpush.msra.mxu0 %v122
    %1050 = vmatmul.f32.gmra.mxu0 %v114
    %v1051 = vpop.f32.mrf.mxu0
    %v1052 = vadd.f32 %v1020, %v1051
    %1053 = vdwg.mxu0
    %1054 = vmatpush.msra.mxu0 %v339
    %1055 = vmatpush.msra.mxu0 %v332
    %1056 = vmatpush.msra.mxu0 %v325
    %1057 = vmatpush.msra.mxu0 %v318
    %1058 = vmatpush.msra.mxu0 %v311
    %1059 = vmatpush.msra.mxu0 %v304
    %1060 = vmatpush.msra.mxu0 %v297
    %1061 = vmatpush.msra.mxu0 %v290
    %1062 = vmatpush.msra.mxu0 %v283
    %1063 = vmatpush.msra.mxu0 %v276
    %1064 = vmatpush.msra.mxu0 %v269
    %1065 = vmatpush.msra.mxu0 %v262
    %1066 = vmatpush.msra.mxu0 %v255
    %1067 = vmatpush.msra.mxu0 %v248
    %1068 = vmatpush.msra.mxu0 %v241
    %1069 = vmatpush.msra.mxu0 %v234
    %1070 = vmatmul.f32.gmra.mxu0 %v115
    %v1071 = vpop.f32.mrf.mxu0
    %v1072 = vadd.f32 %v1052, %v1071
    %1073 = vdwg.mxu0
    %1074 = vmatpush.msra.mxu0 %v451
    %1075 = vmatpush.msra.mxu0 %v444
    %1076 = vmatpush.msra.mxu0 %v437
    %1077 = vmatpush.msra.mxu0 %v430
    %1078 = vmatpush.msra.mxu0 %v423
    %1079 = vmatpush.msra.mxu0 %v416
    %1080 = vmatpush.msra.mxu0 %v409
    %1081 = vmatpush.msra.mxu0 %v402
    %1082 = vmatpush.msra.mxu0 %v395
    %1083 = vmatpush.msra.mxu0 %v388
    %1084 = vmatpush.msra.mxu0 %v381
    %1085 = vmatpush.msra.mxu0 %v374
    %1086 = vmatpush.msra.mxu0 %v367
    %1087 = vmatpush.msra.mxu0 %v360
    %1088 = vmatpush.msra.mxu0 %v353
    %1089 = vmatpush.msra.mxu0 %v346
    %1090 = vmatmul.f32.gmra.mxu0 %v116
    %v1091 = vpop.f32.mrf.mxu0
    %v1092 = vadd.f32 %v1072, %v1091
    %1093 = vdwg.mxu0
    %1094 = vmatpush.msra.mxu0 %v563
    %1095 = vmatpush.msra.mxu0 %v556
    %1096 = vmatpush.msra.mxu0 %v549
    %1097 = vmatpush.msra.mxu0 %v542
    %1098 = vmatpush.msra.mxu0 %v535
    %1099 = vmatpush.msra.mxu0 %v528
    %1100 = vmatpush.msra.mxu0 %v521
    %1101 = vmatpush.msra.mxu0 %v514
    %1102 = vmatpush.msra.mxu0 %v507
    %1103 = vmatpush.msra.mxu0 %v500
    %1104 = vmatpush.msra.mxu0 %v493
    %1105 = vmatpush.msra.mxu0 %v486
    %1106 = vmatpush.msra.mxu0 %v479
    %1107 = vmatpush.msra.mxu0 %v472
    %1108 = vmatpush.msra.mxu0 %v465
    %1109 = vmatpush.msra.mxu0 %v458
    %1110 = vmatmul.f32.gmra.mxu0 %v117
    %v1111 = vpop.f32.mrf.mxu0
    %v1112 = vadd.f32 %v1092, %v1111
    %1113 = vdwg.mxu0
    %1114 = vmatpush.msra.mxu0 %v675
    %1115 = vmatpush.msra.mxu0 %v668
    %1116 = vmatpush.msra.mxu0 %v661
    %1117 = vmatpush.msra.mxu0 %v654
    %1118 = vmatpush.msra.mxu0 %v647
    %1119 = vmatpush.msra.mxu0 %v640
    %1120 = vmatpush.msra.mxu0 %v633
    %1121 = vmatpush.msra.mxu0 %v626
    %1122 = vmatpush.msra.mxu0 %v619
    %1123 = vmatpush.msra.mxu0 %v612
    %1124 = vmatpush.msra.mxu0 %v605
    %1125 = vmatpush.msra.mxu0 %v598
    %1126 = vmatpush.msra.mxu0 %v591
    %1127 = vmatpush.msra.mxu0 %v584
    %1128 = vmatpush.msra.mxu0 %v577
    %1129 = vmatpush.msra.mxu0 %v570
    %1130 = vmatmul.f32.gmra.mxu0 %v118
    %v1131 = vpop.f32.mrf.mxu0
    %v1132 = vadd.f32 %v1112, %v1131
    %1133 = vdwg.mxu0
    %1134 = vmatpush.msra.mxu0 %v787
    %1135 = vmatpush.msra.mxu0 %v780
    %1136 = vmatpush.msra.mxu0 %v773
    %1137 = vmatpush.msra.mxu0 %v766
    %1138 = vmatpush.msra.mxu0 %v759
    %1139 = vmatpush.msra.mxu0 %v752
    %1140 = vmatpush.msra.mxu0 %v745
    %1141 = vmatpush.msra.mxu0 %v738
    %1142 = vmatpush.msra.mxu0 %v731
    %1143 = vmatpush.msra.mxu0 %v724
    %1144 = vmatpush.msra.mxu0 %v717
    %1145 = vmatpush.msra.mxu0 %v710
    %1146 = vmatpush.msra.mxu0 %v703
    %1147 = vmatpush.msra.mxu0 %v696
    %1148 = vmatpush.msra.mxu0 %v689
    %1149 = vmatpush.msra.mxu0 %v682
    %1150 = vmatmul.f32.gmra.mxu0 %v119
    %v1151 = vpop.f32.mrf.mxu0
    %v1152 = vadd.f32 %v1132, %v1151
    %1153 = vdwg.mxu0
    %1154 = vmatpush.msra.mxu0 %v899
    %1155 = vmatpush.msra.mxu0 %v892
    %1156 = vmatpush.msra.mxu0 %v885
    %1157 = vmatpush.msra.mxu0 %v878
    %1158 = vmatpush.msra.mxu0 %v871
    %1159 = vmatpush.msra.mxu0 %v864
    %1160 = vmatpush.msra.mxu0 %v857
    %1161 = vmatpush.msra.mxu0 %v850
    %1162 = vmatpush.msra.mxu0 %v843
    %1163 = vmatpush.msra.mxu0 %v836
    %1164 = vmatpush.msra.mxu0 %v829
    %1165 = vmatpush.msra.mxu0 %v822
    %1166 = vmatpush.msra.mxu0 %v815
    %1167 = vmatpush.msra.mxu0 %v808
    %1168 = vmatpush.msra.mxu0 %v801
    %1169 = vmatpush.msra.mxu0 %v794
    %1170 = vmatmul.f32.gmra.mxu0 %v120
    %v1171 = vpop.f32.mrf.mxu0
    %v1172 = vadd.f32 %v1152, %v1171
    %1173 = vdwg.mxu0
    %1174 = vmatpush.msra.mxu0 %v1011
    %1175 = vmatpush.msra.mxu0 %v1004
    %1176 = vmatpush.msra.mxu0 %v997
    %1177 = vmatpush.msra.mxu0 %v990
    %1178 = vmatpush.msra.mxu0 %v983
    %1179 = vmatpush.msra.mxu0 %v976
    %1180 = vmatpush.msra.mxu0 %v969
    %1181 = vmatpush.msra.mxu0 %v962
    %1182 = vmatpush.msra.mxu0 %v955
    %1183 = vmatpush.msra.mxu0 %v948
    %1184 = vmatpush.msra.mxu0 %v941
    %1185 = vmatpush.msra.mxu0 %v934
    %1186 = vmatpush.msra.mxu0 %v927
    %1187 = vmatpush.msra.mxu0 %v920
    %1188 = vmatpush.msra.mxu0 %v913
    %1189 = vmatpush.msra.mxu0 %v906
    %1190 = vmatmul.f32.gmra.mxu0 %v121
    %v1191 = vpop.f32.mrf.mxu0
    %v1192 = vadd.f32 %v1172, %v1191
    %1193 = vdwg.mxu0
    %1194 = vmatpush.msra.mxu0 %v228
    %1195 = vmatpush.msra.mxu0 %v221
    %1196 = vmatpush.msra.mxu0 %v214
    %1197 = vmatpush.msra.mxu0 %v207
    %1198 = vmatpush.msra.mxu0 %v200
    %1199 = vmatpush.msra.mxu0 %v193
    %1200 = vmatpush.msra.mxu0 %v186
    %1201 = vmatpush.msra.mxu0 %v179
    %1202 = vmatpush.msra.mxu0 %v172
    %1203 = vmatpush.msra.mxu0 %v165
    %1204 = vmatpush.msra.mxu0 %v158
    %1205 = vmatpush.msra.mxu0 %v151
    %1206 = vmatpush.msra.mxu0 %v144
    %1207 = vmatpush.msra.mxu0 %v137
    %1208 = vmatpush.msra.mxu0 %v130
    %1209 = vmatpush.msra.mxu0 %v123
    %1210 = vmatmul.f32.gmra.mxu0 %v114
    %v1211 = vpop.f32.mrf.mxu0
    %v1212 = vadd.f32 %v1021, %v1211
    %1213 = vdwg.mxu0
    %1214 = vmatpush.msra.mxu0 %v340
    %1215 = vmatpush.msra.mxu0 %v333
    %1216 = vmatpush.msra.mxu0 %v326
    %1217 = vmatpush.msra.mxu0 %v319
    %1218 = vmatpush.msra.mxu0 %v312
    %1219 = vmatpush.msra.mxu0 %v305
    %1220 = vmatpush.msra.mxu0 %v298
    %1221 = vmatpush.msra.mxu0 %v291
    %1222 = vmatpush.msra.mxu0 %v284
    %1223 = vmatpush.msra.mxu0 %v277
    %1224 = vmatpush.msra.mxu0 %v270
    %1225 = vmatpush.msra.mxu0 %v263
    %1226 = vmatpush.msra.mxu0 %v256
    %1227 = vmatpush.msra.mxu0 %v249
    %1228 = vmatpush.msra.mxu0 %v242
    %1229 = vmatpush.msra.mxu0 %v235
    %1230 = vmatmul.f32.gmra.mxu0 %v115
    %v1231 = vpop.f32.mrf.mxu0
    %v1232 = vadd.f32 %v1212, %v1231
    %1233 = vdwg.mxu0
    %1234 = vmatpush.msra.mxu0 %v452
    %1235 = vmatpush.msra.mxu0 %v445
    %1236 = vmatpush.msra.mxu0 %v438
    %1237 = vmatpush.msra.mxu0 %v431
    %1238 = vmatpush.msra.mxu0 %v424
    %1239 = vmatpush.msra.mxu0 %v417
    %1240 = vmatpush.msra.mxu0 %v410
    %1241 = vmatpush.msra.mxu0 %v403
    %1242 = vmatpush.msra.mxu0 %v396
    %1243 = vmatpush.msra.mxu0 %v389
    %1244 = vmatpush.msra.mxu0 %v382
    %1245 = vmatpush.msra.mxu0 %v375
    %1246 = vmatpush.msra.mxu0 %v368
    %1247 = vmatpush.msra.mxu0 %v361
    %1248 = vmatpush.msra.mxu0 %v354
    %1249 = vmatpush.msra.mxu0 %v347
    %1250 = vmatmul.f32.gmra.mxu0 %v116
    %v1251 = vpop.f32.mrf.mxu0
    %v1252 = vadd.f32 %v1232, %v1251
    %1253 = vdwg.mxu0
    %1254 = vmatpush.msra.mxu0 %v564
    %1255 = vmatpush.msra.mxu0 %v557
    %1256 = vmatpush.msra.mxu0 %v550
    %1257 = vmatpush.msra.mxu0 %v543
    %1258 = vmatpush.msra.mxu0 %v536
    %1259 = vmatpush.msra.mxu0 %v529
    %1260 = vmatpush.msra.mxu0 %v522
    %1261 = vmatpush.msra.mxu0 %v515
    %1262 = vmatpush.msra.mxu0 %v508
    %1263 = vmatpush.msra.mxu0 %v501
    %1264 = vmatpush.msra.mxu0 %v494
    %1265 = vmatpush.msra.mxu0 %v487
    %1266 = vmatpush.msra.mxu0 %v480
    %1267 = vmatpush.msra.mxu0 %v473
    %1268 = vmatpush.msra.mxu0 %v466
    %1269 = vmatpush.msra.mxu0 %v459
    %1270 = vmatmul.f32.gmra.mxu0 %v117
    %v1271 = vpop.f32.mrf.mxu0
    %v1272 = vadd.f32 %v1252, %v1271
    %1273 = vdwg.mxu0
    %1274 = vmatpush.msra.mxu0 %v676
    %1275 = vmatpush.msra.mxu0 %v669
    %1276 = vmatpush.msra.mxu0 %v662
    %1277 = vmatpush.msra.mxu0 %v655
    %1278 = vmatpush.msra.mxu0 %v648
    %1279 = vmatpush.msra.mxu0 %v641
    %1280 = vmatpush.msra.mxu0 %v634
    %1281 = vmatpush.msra.mxu0 %v627
    %1282 = vmatpush.msra.mxu0 %v620
    %1283 = vmatpush.msra.mxu0 %v613
    %1284 = vmatpush.msra.mxu0 %v606
    %1285 = vmatpush.msra.mxu0 %v599
    %1286 = vmatpush.msra.mxu0 %v592
    %1287 = vmatpush.msra.mxu0 %v585
    %1288 = vmatpush.msra.mxu0 %v578
    %1289 = vmatpush.msra.mxu0 %v571
    %1290 = vmatmul.f32.gmra.mxu0 %v118
    %v1291 = vpop.f32.mrf.mxu0
    %v1292 = vadd.f32 %v1272, %v1291
    %1293 = vdwg.mxu0
    %1294 = vmatpush.msra.mxu0 %v788
    %1295 = vmatpush.msra.mxu0 %v781
    %1296 = vmatpush.msra.mxu0 %v774
    %1297 = vmatpush.msra.mxu0 %v767
    %1298 = vmatpush.msra.mxu0 %v760
    %1299 = vmatpush.msra.mxu0 %v753
    %1300 = vmatpush.msra.mxu0 %v746
    %1301 = vmatpush.msra.mxu0 %v739
    %1302 = vmatpush.msra.mxu0 %v732
    %1303 = vmatpush.msra.mxu0 %v725
    %1304 = vmatpush.msra.mxu0 %v718
    %1305 = vmatpush.msra.mxu0 %v711
    %1306 = vmatpush.msra.mxu0 %v704
    %1307 = vmatpush.msra.mxu0 %v697
    %1308 = vmatpush.msra.mxu0 %v690
    %1309 = vmatpush.msra.mxu0 %v683
    %1310 = vmatmul.f32.gmra.mxu0 %v119
    %v1311 = vpop.f32.mrf.mxu0
    %v1312 = vadd.f32 %v1292, %v1311
    %1313 = vdwg.mxu0
    %1314 = vmatpush.msra.mxu0 %v900
    %1315 = vmatpush.msra.mxu0 %v893
    %1316 = vmatpush.msra.mxu0 %v886
    %1317 = vmatpush.msra.mxu0 %v879
    %1318 = vmatpush.msra.mxu0 %v872
    %1319 = vmatpush.msra.mxu0 %v865
    %1320 = vmatpush.msra.mxu0 %v858
    %1321 = vmatpush.msra.mxu0 %v851
    %1322 = vmatpush.msra.mxu0 %v844
    %1323 = vmatpush.msra.mxu0 %v837
    %1324 = vmatpush.msra.mxu0 %v830
    %1325 = vmatpush.msra.mxu0 %v823
    %1326 = vmatpush.msra.mxu0 %v816
    %1327 = vmatpush.msra.mxu0 %v809
    %1328 = vmatpush.msra.mxu0 %v802
    %1329 = vmatpush.msra.mxu0 %v795
    %1330 = vmatmul.f32.gmra.mxu0 %v120
    %v1331 = vpop.f32.mrf.mxu0
    %v1332 = vadd.f32 %v1312, %v1331
    %1333 = vdwg.mxu0
    %1334 = vmatpush.msra.mxu0 %v1012
    %1335 = vmatpush.msra.mxu0 %v1005
    %1336 = vmatpush.msra.mxu0 %v998
    %1337 = vmatpush.msra.mxu0 %v991
    %1338 = vmatpush.msra.mxu0 %v984
    %1339 = vmatpush.msra.mxu0 %v977
    %1340 = vmatpush.msra.mxu0 %v970
    %1341 = vmatpush.msra.mxu0 %v963
    %1342 = vmatpush.msra.mxu0 %v956
    %1343 = vmatpush.msra.mxu0 %v949
    %1344 = vmatpush.msra.mxu0 %v942
    %1345 = vmatpush.msra.mxu0 %v935
    %1346 = vmatpush.msra.mxu0 %v928
    %1347 = vmatpush.msra.mxu0 %v921
    %1348 = vmatpush.msra.mxu0 %v914
    %1349 = vmatpush.msra.mxu0 %v907
    %1350 = vmatmul.f32.gmra.mxu0 %v121
    %v1351 = vpop.f32.mrf.mxu0
    %v1352 = vadd.f32 %v1332, %v1351
    %1353 = vdwg.mxu0
    %1354 = vmatpush.msra.mxu0 %v229
    %1355 = vmatpush.msra.mxu0 %v222
    %1356 = vmatpush.msra.mxu0 %v215
    %1357 = vmatpush.msra.mxu0 %v208
    %1358 = vmatpush.msra.mxu0 %v201
    %1359 = vmatpush.msra.mxu0 %v194
    %1360 = vmatpush.msra.mxu0 %v187
    %1361 = vmatpush.msra.mxu0 %v180
    %1362 = vmatpush.msra.mxu0 %v173
    %1363 = vmatpush.msra.mxu0 %v166
    %1364 = vmatpush.msra.mxu0 %v159
    %1365 = vmatpush.msra.mxu0 %v152
    %1366 = vmatpush.msra.mxu0 %v145
    %1367 = vmatpush.msra.mxu0 %v138
    %1368 = vmatpush.msra.mxu0 %v131
    %1369 = vmatpush.msra.mxu0 %v124
    %1370 = vmatmul.f32.gmra.mxu0 %v114
    %v1371 = vpop.f32.mrf.mxu0
    %v1372 = vadd.f32 %v1022, %v1371
    %1373 = vdwg.mxu0
    %1374 = vmatpush.msra.mxu0 %v341
    %1375 = vmatpush.msra.mxu0 %v334
    %1376 = vmatpush.msra.mxu0 %v327
    %1377 = vmatpush.msra.mxu0 %v320
    %1378 = vmatpush.msra.mxu0 %v313
    %1379 = vmatpush.msra.mxu0 %v306
    %1380 = vmatpush.msra.mxu0 %v299
    %1381 = vmatpush.msra.mxu0 %v292
    %1382 = vmatpush.msra.mxu0 %v285
    %1383 = vmatpush.msra.mxu0 %v278
    %1384 = vmatpush.msra.mxu0 %v271
    %1385 = vmatpush.msra.mxu0 %v264
    %1386 = vmatpush.msra.mxu0 %v257
    %1387 = vmatpush.msra.mxu0 %v250
    %1388 = vmatpush.msra.mxu0 %v243
    %1389 = vmatpush.msra.mxu0 %v236
    %1390 = vmatmul.f32.gmra.mxu0 %v115
    %v1391 = vpop.f32.mrf.mxu0
    %v1392 = vadd.f32 %v1372, %v1391
    %1393 = vdwg.mxu0
    %1394 = vmatpush.msra.mxu0 %v453
    %1395 = vmatpush.msra.mxu0 %v446
    %1396 = vmatpush.msra.mxu0 %v439
    %1397 = vmatpush.msra.mxu0 %v432
    %1398 = vmatpush.msra.mxu0 %v425
    %1399 = vmatpush.msra.mxu0 %v418
    %1400 = vmatpush.msra.mxu0 %v411
    %1401 = vmatpush.msra.mxu0 %v404
    %1402 = vmatpush.msra.mxu0 %v397
    %1403 = vmatpush.msra.mxu0 %v390
    %1404 = vmatpush.msra.mxu0 %v383
    %1405 = vmatpush.msra.mxu0 %v376
    %1406 = vmatpush.msra.mxu0 %v369
    %1407 = vmatpush.msra.mxu0 %v362
    %1408 = vmatpush.msra.mxu0 %v355
    %1409 = vmatpush.msra.mxu0 %v348
    %1410 = vmatmul.f32.gmra.mxu0 %v116
    %v1411 = vpop.f32.mrf.mxu0
    %v1412 = vadd.f32 %v1392, %v1411
    %1413 = vdwg.mxu0
    %1414 = vmatpush.msra.mxu0 %v565
    %1415 = vmatpush.msra.mxu0 %v558
    %1416 = vmatpush.msra.mxu0 %v551
    %1417 = vmatpush.msra.mxu0 %v544
    %1418 = vmatpush.msra.mxu0 %v537
    %1419 = vmatpush.msra.mxu0 %v530
    %1420 = vmatpush.msra.mxu0 %v523
    %1421 = vmatpush.msra.mxu0 %v516
    %1422 = vmatpush.msra.mxu0 %v509
    %1423 = vmatpush.msra.mxu0 %v502
    %1424 = vmatpush.msra.mxu0 %v495
    %1425 = vmatpush.msra.mxu0 %v488
    %1426 = vmatpush.msra.mxu0 %v481
    %1427 = vmatpush.msra.mxu0 %v474
    %1428 = vmatpush.msra.mxu0 %v467
    %1429 = vmatpush.msra.mxu0 %v460
    %1430 = vmatmul.f32.gmra.mxu0 %v117
    %v1431 = vpop.f32.mrf.mxu0
    %v1432 = vadd.f32 %v1412, %v1431
    %1433 = vdwg.mxu0
    %1434 = vmatpush.msra.mxu0 %v677
    %1435 = vmatpush.msra.mxu0 %v670
    %1436 = vmatpush.msra.mxu0 %v663
    %1437 = vmatpush.msra.mxu0 %v656
    %1438 = vmatpush.msra.mxu0 %v649
    %1439 = vmatpush.msra.mxu0 %v642
    %1440 = vmatpush.msra.mxu0 %v635
    %1441 = vmatpush.msra.mxu0 %v628
    %1442 = vmatpush.msra.mxu0 %v621
    %1443 = vmatpush.msra.mxu0 %v614
    %1444 = vmatpush.msra.mxu0 %v607
    %1445 = vmatpush.msra.mxu0 %v600
    %1446 = vmatpush.msra.mxu0 %v593
    %1447 = vmatpush.msra.mxu0 %v586
    %1448 = vmatpush.msra.mxu0 %v579
    %1449 = vmatpush.msra.mxu0 %v572
    %1450 = vmatmul.f32.gmra.mxu0 %v118
    %v1451 = vpop.f32.mrf.mxu0
    %v1452 = vadd.f32 %v1432, %v1451
    %1453 = vdwg.mxu0
    %1454 = vmatpush.msra.mxu0 %v789
    %1455 = vmatpush.msra.mxu0 %v782
    %1456 = vmatpush.msra.mxu0 %v775
    %1457 = vmatpush.msra.mxu0 %v768
    %1458 = vmatpush.msra.mxu0 %v761
    %1459 = vmatpush.msra.mxu0 %v754
    %1460 = vmatpush.msra.mxu0 %v747
    %1461 = vmatpush.msra.mxu0 %v740
    %1462 = vmatpush.msra.mxu0 %v733
    %1463 = vmatpush.msra.mxu0 %v726
    %1464 = vmatpush.msra.mxu0 %v719
    %1465 = vmatpush.msra.mxu0 %v712
    %1466 = vmatpush.msra.mxu0 %v705
    %1467 = vmatpush.msra.mxu0 %v698
    %1468 = vmatpush.msra.mxu0 %v691
    %1469 = vmatpush.msra.mxu0 %v684
    %1470 = vmatmul.f32.gmra.mxu0 %v119
    %v1471 = vpop.f32.mrf.mxu0
    %v1472 = vadd.f32 %v1452, %v1471
    %1473 = vdwg.mxu0
    %1474 = vmatpush.msra.mxu0 %v901
    %1475 = vmatpush.msra.mxu0 %v894
    %1476 = vmatpush.msra.mxu0 %v887
    %1477 = vmatpush.msra.mxu0 %v880
    %1478 = vmatpush.msra.mxu0 %v873
    %1479 = vmatpush.msra.mxu0 %v866
    %1480 = vmatpush.msra.mxu0 %v859
    %1481 = vmatpush.msra.mxu0 %v852
    %1482 = vmatpush.msra.mxu0 %v845
    %1483 = vmatpush.msra.mxu0 %v838
    %1484 = vmatpush.msra.mxu0 %v831
    %1485 = vmatpush.msra.mxu0 %v824
    %1486 = vmatpush.msra.mxu0 %v817
    %1487 = vmatpush.msra.mxu0 %v810
    %1488 = vmatpush.msra.mxu0 %v803
    %1489 = vmatpush.msra.mxu0 %v796
    %1490 = vmatmul.f32.gmra.mxu0 %v120
    %v1491 = vpop.f32.mrf.mxu0
    %v1492 = vadd.f32 %v1472, %v1491
    %1493 = vdwg.mxu0
    %1494 = vmatpush.msra.mxu0 %v1013
    %1495 = vmatpush.msra.mxu0 %v1006
    %1496 = vmatpush.msra.mxu0 %v999
    %1497 = vmatpush.msra.mxu0 %v992
    %1498 = vmatpush.msra.mxu0 %v985
    %1499 = vmatpush.msra.mxu0 %v978
    %1500 = vmatpush.msra.mxu0 %v971
    %1501 = vmatpush.msra.mxu0 %v964
    %1502 = vmatpush.msra.mxu0 %v957
    %1503 = vmatpush.msra.mxu0 %v950
    %1504 = vmatpush.msra.mxu0 %v943
    %1505 = vmatpush.msra.mxu0 %v936
    %1506 = vmatpush.msra.mxu0 %v929
    %1507 = vmatpush.msra.mxu0 %v922
    %1508 = vmatpush.msra.mxu0 %v915
    %1509 = vmatpush.msra.mxu0 %v908
    %1510 = vmatmul.f32.gmra.mxu0 %v121
    %v1511 = vpop.f32.mrf.mxu0
    %v1512 = vadd.f32 %v1492, %v1511
    %1513 = vdwg.mxu0
    %1514 = vmatpush.msra.mxu0 %v230
    %1515 = vmatpush.msra.mxu0 %v223
    %1516 = vmatpush.msra.mxu0 %v216
    %1517 = vmatpush.msra.mxu0 %v209
    %1518 = vmatpush.msra.mxu0 %v202
    %1519 = vmatpush.msra.mxu0 %v195
    %1520 = vmatpush.msra.mxu0 %v188
    %1521 = vmatpush.msra.mxu0 %v181
    %1522 = vmatpush.msra.mxu0 %v174
    %1523 = vmatpush.msra.mxu0 %v167
    %1524 = vmatpush.msra.mxu0 %v160
    %1525 = vmatpush.msra.mxu0 %v153
    %1526 = vmatpush.msra.mxu0 %v146
    %1527 = vmatpush.msra.mxu0 %v139
    %1528 = vmatpush.msra.mxu0 %v132
    %1529 = vmatpush.msra.mxu0 %v125
    %1530 = vmatmul.f32.gmra.mxu0 %v114
    %v1531 = vpop.f32.mrf.mxu0
    %v1532 = vadd.f32 %v1023, %v1531
    %1533 = vdwg.mxu0
    %1534 = vmatpush.msra.mxu0 %v342
    %1535 = vmatpush.msra.mxu0 %v335
    %1536 = vmatpush.msra.mxu0 %v328
    %1537 = vmatpush.msra.mxu0 %v321
    %1538 = vmatpush.msra.mxu0 %v314
    %1539 = vmatpush.msra.mxu0 %v307
    %1540 = vmatpush.msra.mxu0 %v300
    %1541 = vmatpush.msra.mxu0 %v293
    %1542 = vmatpush.msra.mxu0 %v286
    %1543 = vmatpush.msra.mxu0 %v279
    %1544 = vmatpush.msra.mxu0 %v272
    %1545 = vmatpush.msra.mxu0 %v265
    %1546 = vmatpush.msra.mxu0 %v258
    %1547 = vmatpush.msra.mxu0 %v251
    %1548 = vmatpush.msra.mxu0 %v244
    %1549 = vmatpush.msra.mxu0 %v237
    %1550 = vmatmul.f32.gmra.mxu0 %v115
    %v1551 = vpop.f32.mrf.mxu0
    %v1552 = vadd.f32 %v1532, %v1551
    %1553 = vdwg.mxu0
    %1554 = vmatpush.msra.mxu0 %v454
    %1555 = vmatpush.msra.mxu0 %v447
    %1556 = vmatpush.msra.mxu0 %v440
    %1557 = vmatpush.msra.mxu0 %v433
    %1558 = vmatpush.msra.mxu0 %v426
    %1559 = vmatpush.msra.mxu0 %v419
    %1560 = vmatpush.msra.mxu0 %v412
    %1561 = vmatpush.msra.mxu0 %v405
    %1562 = vmatpush.msra.mxu0 %v398
    %1563 = vmatpush.msra.mxu0 %v391
    %1564 = vmatpush.msra.mxu0 %v384
    %1565 = vmatpush.msra.mxu0 %v377
    %1566 = vmatpush.msra.mxu0 %v370
    %1567 = vmatpush.msra.mxu0 %v363
    %1568 = vmatpush.msra.mxu0 %v356
    %1569 = vmatpush.msra.mxu0 %v349
    %1570 = vmatmul.f32.gmra.mxu0 %v116
    %v1571 = vpop.f32.mrf.mxu0
    %v1572 = vadd.f32 %v1552, %v1571
    %1573 = vdwg.mxu0
    %1574 = vmatpush.msra.mxu0 %v566
    %1575 = vmatpush.msra.mxu0 %v559
    %1576 = vmatpush.msra.mxu0 %v552
    %1577 = vmatpush.msra.mxu0 %v545
    %1578 = vmatpush.msra.mxu0 %v538
    %1579 = vmatpush.msra.mxu0 %v531
    %1580 = vmatpush.msra.mxu0 %v524
    %1581 = vmatpush.msra.mxu0 %v517
    %1582 = vmatpush.msra.mxu0 %v510
    %1583 = vmatpush.msra.mxu0 %v503
    %1584 = vmatpush.msra.mxu0 %v496
    %1585 = vmatpush.msra.mxu0 %v489
    %1586 = vmatpush.msra.mxu0 %v482
    %1587 = vmatpush.msra.mxu0 %v475
    %1588 = vmatpush.msra.mxu0 %v468
    %1589 = vmatpush.msra.mxu0 %v461
    %1590 = vmatmul.f32.gmra.mxu0 %v117
    %v1591 = vpop.f32.mrf.mxu0
    %v1592 = vadd.f32 %v1572, %v1591
    %1593 = vdwg.mxu0
    %1594 = vmatpush.msra.mxu0 %v678
    %1595 = vmatpush.msra.mxu0 %v671
    %1596 = vmatpush.msra.mxu0 %v664
    %1597 = vmatpush.msra.mxu0 %v657
    %1598 = vmatpush.msra.mxu0 %v650
    %1599 = vmatpush.msra.mxu0 %v643
    %1600 = vmatpush.msra.mxu0 %v636
    %1601 = vmatpush.msra.mxu0 %v629
    %1602 = vmatpush.msra.mxu0 %v622
    %1603 = vmatpush.msra.mxu0 %v615
    %1604 = vmatpush.msra.mxu0 %v608
    %1605 = vmatpush.msra.mxu0 %v601
    %1606 = vmatpush.msra.mxu0 %v594
    %1607 = vmatpush.msra.mxu0 %v587
    %1608 = vmatpush.msra.mxu0 %v580
    %1609 = vmatpush.msra.mxu0 %v573
    %1610 = vmatmul.f32.gmra.mxu0 %v118
    %v1611 = vpop.f32.mrf.mxu0
    %v1612 = vadd.f32 %v1592, %v1611
    %1613 = vdwg.mxu0
    %1614 = vmatpush.msra.mxu0 %v790
    %1615 = vmatpush.msra.mxu0 %v783
    %1616 = vmatpush.msra.mxu0 %v776
    %1617 = vmatpush.msra.mxu0 %v769
    %1618 = vmatpush.msra.mxu0 %v762
    %1619 = vmatpush.msra.mxu0 %v755
    %1620 = vmatpush.msra.mxu0 %v748
    %1621 = vmatpush.msra.mxu0 %v741
    %1622 = vmatpush.msra.mxu0 %v734
    %1623 = vmatpush.msra.mxu0 %v727
    %1624 = vmatpush.msra.mxu0 %v720
    %1625 = vmatpush.msra.mxu0 %v713
    %1626 = vmatpush.msra.mxu0 %v706
    %1627 = vmatpush.msra.mxu0 %v699
    %1628 = vmatpush.msra.mxu0 %v692
    %1629 = vmatpush.msra.mxu0 %v685
    %1630 = vmatmul.f32.gmra.mxu0 %v119
    %v1631 = vpop.f32.mrf.mxu0
    %v1632 = vadd.f32 %v1612, %v1631
    %1633 = vdwg.mxu0
    %1634 = vmatpush.msra.mxu0 %v902
    %1635 = vmatpush.msra.mxu0 %v895
    %1636 = vmatpush.msra.mxu0 %v888
    %1637 = vmatpush.msra.mxu0 %v881
    %1638 = vmatpush.msra.mxu0 %v874
    %1639 = vmatpush.msra.mxu0 %v867
    %1640 = vmatpush.msra.mxu0 %v860
    %1641 = vmatpush.msra.mxu0 %v853
    %1642 = vmatpush.msra.mxu0 %v846
    %1643 = vmatpush.msra.mxu0 %v839
    %1644 = vmatpush.msra.mxu0 %v832
    %1645 = vmatpush.msra.mxu0 %v825
    %1646 = vmatpush.msra.mxu0 %v818
    %1647 = vmatpush.msra.mxu0 %v811
    %1648 = vmatpush.msra.mxu0 %v804
    %1649 = vmatpush.msra.mxu0 %v797
    %1650 = vmatmul.f32.gmra.mxu0 %v120
    %v1651 = vpop.f32.mrf.mxu0
    %v1652 = vadd.f32 %v1632, %v1651
    %1653 = vdwg.mxu0
    %1654 = vmatpush.msra.mxu0 %v1014
    %1655 = vmatpush.msra.mxu0 %v1007
    %1656 = vmatpush.msra.mxu0 %v1000
    %1657 = vmatpush.msra.mxu0 %v993
    %1658 = vmatpush.msra.mxu0 %v986
    %1659 = vmatpush.msra.mxu0 %v979
    %1660 = vmatpush.msra.mxu0 %v972
    %1661 = vmatpush.msra.mxu0 %v965
    %1662 = vmatpush.msra.mxu0 %v958
    %1663 = vmatpush.msra.mxu0 %v951
    %1664 = vmatpush.msra.mxu0 %v944
    %1665 = vmatpush.msra.mxu0 %v937
    %1666 = vmatpush.msra.mxu0 %v930
    %1667 = vmatpush.msra.mxu0 %v923
    %1668 = vmatpush.msra.mxu0 %v916
    %1669 = vmatpush.msra.mxu0 %v909
    %1670 = vmatmul.f32.gmra.mxu0 %v121
    %v1671 = vpop.f32.mrf.mxu0
    %v1672 = vadd.f32 %v1652, %v1671
    %1673 = vdwg.mxu0
    %1674 = vmatpush.msra.mxu0 %v231
    %1675 = vmatpush.msra.mxu0 %v224
    %1676 = vmatpush.msra.mxu0 %v217
    %1677 = vmatpush.msra.mxu0 %v210
    %1678 = vmatpush.msra.mxu0 %v203
    %1679 = vmatpush.msra.mxu0 %v196
    %1680 = vmatpush.msra.mxu0 %v189
    %1681 = vmatpush.msra.mxu0 %v182
    %1682 = vmatpush.msra.mxu0 %v175
    %1683 = vmatpush.msra.mxu0 %v168
    %1684 = vmatpush.msra.mxu0 %v161
    %1685 = vmatpush.msra.mxu0 %v154
    %1686 = vmatpush.msra.mxu0 %v147
    %1687 = vmatpush.msra.mxu0 %v140
    %1688 = vmatpush.msra.mxu0 %v133
    %1689 = vmatpush.msra.mxu0 %v126
    %1690 = vmatmul.f32.gmra.mxu0 %v114
    %v1691 = vpop.f32.mrf.mxu0
    %v1692 = vadd.f32 %v1024, %v1691
    %1693 = vdwg.mxu0
    %1694 = vmatpush.msra.mxu0 %v343
    %1695 = vmatpush.msra.mxu0 %v336
    %1696 = vmatpush.msra.mxu0 %v329
    %1697 = vmatpush.msra.mxu0 %v322
    %1698 = vmatpush.msra.mxu0 %v315
    %1699 = vmatpush.msra.mxu0 %v308
    %1700 = vmatpush.msra.mxu0 %v301
    %1701 = vmatpush.msra.mxu0 %v294
    %1702 = vmatpush.msra.mxu0 %v287
    %1703 = vmatpush.msra.mxu0 %v280
    %1704 = vmatpush.msra.mxu0 %v273
    %1705 = vmatpush.msra.mxu0 %v266
    %1706 = vmatpush.msra.mxu0 %v259
    %1707 = vmatpush.msra.mxu0 %v252
    %1708 = vmatpush.msra.mxu0 %v245
    %1709 = vmatpush.msra.mxu0 %v238
    %1710 = vmatmul.f32.gmra.mxu0 %v115
    %v1711 = vpop.f32.mrf.mxu0
    %v1712 = vadd.f32 %v1692, %v1711
    %1713 = vdwg.mxu0
    %1714 = vmatpush.msra.mxu0 %v455
    %1715 = vmatpush.msra.mxu0 %v448
    %1716 = vmatpush.msra.mxu0 %v441
    %1717 = vmatpush.msra.mxu0 %v434
    %1718 = vmatpush.msra.mxu0 %v427
    %1719 = vmatpush.msra.mxu0 %v420
    %1720 = vmatpush.msra.mxu0 %v413
    %1721 = vmatpush.msra.mxu0 %v406
    %1722 = vmatpush.msra.mxu0 %v399
    %1723 = vmatpush.msra.mxu0 %v392
    %1724 = vmatpush.msra.mxu0 %v385
    %1725 = vmatpush.msra.mxu0 %v378
    %1726 = vmatpush.msra.mxu0 %v371
    %1727 = vmatpush.msra.mxu0 %v364
    %1728 = vmatpush.msra.mxu0 %v357
    %1729 = vmatpush.msra.mxu0 %v350
    %1730 = vmatmul.f32.gmra.mxu0 %v116
    %v1731 = vpop.f32.mrf.mxu0
    %v1732 = vadd.f32 %v1712, %v1731
    %1733 = vdwg.mxu0
    %1734 = vmatpush.msra.mxu0 %v567
    %1735 = vmatpush.msra.mxu0 %v560
    %1736 = vmatpush.msra.mxu0 %v553
    %1737 = vmatpush.msra.mxu0 %v546
    %1738 = vmatpush.msra.mxu0 %v539
    %1739 = vmatpush.msra.mxu0 %v532
    %1740 = vmatpush.msra.mxu0 %v525
    %1741 = vmatpush.msra.mxu0 %v518
    %1742 = vmatpush.msra.mxu0 %v511
    %1743 = vmatpush.msra.mxu0 %v504
    %1744 = vmatpush.msra.mxu0 %v497
    %1745 = vmatpush.msra.mxu0 %v490
    %1746 = vmatpush.msra.mxu0 %v483
    %1747 = vmatpush.msra.mxu0 %v476
    %1748 = vmatpush.msra.mxu0 %v469
    %1749 = vmatpush.msra.mxu0 %v462
    %1750 = vmatmul.f32.gmra.mxu0 %v117
    %v1751 = vpop.f32.mrf.mxu0
    %v1752 = vadd.f32 %v1732, %v1751
    %1753 = vdwg.mxu0
    %1754 = vmatpush.msra.mxu0 %v679
    %1755 = vmatpush.msra.mxu0 %v672
    %1756 = vmatpush.msra.mxu0 %v665
    %1757 = vmatpush.msra.mxu0 %v658
    %1758 = vmatpush.msra.mxu0 %v651
    %1759 = vmatpush.msra.mxu0 %v644
    %1760 = vmatpush.msra.mxu0 %v637
    %1761 = vmatpush.msra.mxu0 %v630
    %1762 = vmatpush.msra.mxu0 %v623
    %1763 = vmatpush.msra.mxu0 %v616
    %1764 = vmatpush.msra.mxu0 %v609
    %1765 = vmatpush.msra.mxu0 %v602
    %1766 = vmatpush.msra.mxu0 %v595
    %1767 = vmatpush.msra.mxu0 %v588
    %1768 = vmatpush.msra.mxu0 %v581
    %1769 = vmatpush.msra.mxu0 %v574
    %1770 = vmatmul.f32.gmra.mxu0 %v118
    %v1771 = vpop.f32.mrf.mxu0
    %v1772 = vadd.f32 %v1752, %v1771
    %1773 = vdwg.mxu0
    %1774 = vmatpush.msra.mxu0 %v791
    %1775 = vmatpush.msra.mxu0 %v784
    %1776 = vmatpush.msra.mxu0 %v777
    %1777 = vmatpush.msra.mxu0 %v770
    %1778 = vmatpush.msra.mxu0 %v763
    %1779 = vmatpush.msra.mxu0 %v756
    %1780 = vmatpush.msra.mxu0 %v749
    %1781 = vmatpush.msra.mxu0 %v742
    %1782 = vmatpush.msra.mxu0 %v735
    %1783 = vmatpush.msra.mxu0 %v728
    %1784 = vmatpush.msra.mxu0 %v721
    %1785 = vmatpush.msra.mxu0 %v714
    %1786 = vmatpush.msra.mxu0 %v707
    %1787 = vmatpush.msra.mxu0 %v700
    %1788 = vmatpush.msra.mxu0 %v693
    %1789 = vmatpush.msra.mxu0 %v686
    %1790 = vmatmul.f32.gmra.mxu0 %v119
    %v1791 = vpop.f32.mrf.mxu0
    %v1792 = vadd.f32 %v1772, %v1791
    %1793 = vdwg.mxu0
    %1794 = vmatpush.msra.mxu0 %v903
    %1795 = vmatpush.msra.mxu0 %v896
    %1796 = vmatpush.msra.mxu0 %v889
    %1797 = vmatpush.msra.mxu0 %v882
    %1798 = vmatpush.msra.mxu0 %v875
    %1799 = vmatpush.msra.mxu0 %v868
    %1800 = vmatpush.msra.mxu0 %v861
    %1801 = vmatpush.msra.mxu0 %v854
    %1802 = vmatpush.msra.mxu0 %v847
    %1803 = vmatpush.msra.mxu0 %v840
    %1804 = vmatpush.msra.mxu0 %v833
    %1805 = vmatpush.msra.mxu0 %v826
    %1806 = vmatpush.msra.mxu0 %v819
    %1807 = vmatpush.msra.mxu0 %v812
    %1808 = vmatpush.msra.mxu0 %v805
    %1809 = vmatpush.msra.mxu0 %v798
    %1810 = vmatmul.f32.gmra.mxu0 %v120
    %v1811 = vpop.f32.mrf.mxu0
    %v1812 = vadd.f32 %v1792, %v1811
    %1813 = vdwg.mxu0
    %1814 = vmatpush.msra.mxu0 %v1015
    %1815 = vmatpush.msra.mxu0 %v1008
    %1816 = vmatpush.msra.mxu0 %v1001
    %1817 = vmatpush.msra.mxu0 %v994
    %1818 = vmatpush.msra.mxu0 %v987
    %1819 = vmatpush.msra.mxu0 %v980
    %1820 = vmatpush.msra.mxu0 %v973
    %1821 = vmatpush.msra.mxu0 %v966
    %1822 = vmatpush.msra.mxu0 %v959
    %1823 = vmatpush.msra.mxu0 %v952
    %1824 = vmatpush.msra.mxu0 %v945
    %1825 = vmatpush.msra.mxu0 %v938
    %1826 = vmatpush.msra.mxu0 %v931
    %1827 = vmatpush.msra.mxu0 %v924
    %1828 = vmatpush.msra.mxu0 %v917
    %1829 = vmatpush.msra.mxu0 %v910
    %1830 = vmatmul.f32.gmra.mxu0 %v121
    %v1831 = vpop.f32.mrf.mxu0
    %v1832 = vadd.f32 %v1812, %v1831
    %1833 = vdwg.mxu0
    %1834 = vmatpush.msra.mxu0 %v232
    %1835 = vmatpush.msra.mxu0 %v225
    %1836 = vmatpush.msra.mxu0 %v218
    %1837 = vmatpush.msra.mxu0 %v211
    %1838 = vmatpush.msra.mxu0 %v204
    %1839 = vmatpush.msra.mxu0 %v197
    %1840 = vmatpush.msra.mxu0 %v190
    %1841 = vmatpush.msra.mxu0 %v183
    %1842 = vmatpush.msra.mxu0 %v176
    %1843 = vmatpush.msra.mxu0 %v169
    %1844 = vmatpush.msra.mxu0 %v162
    %1845 = vmatpush.msra.mxu0 %v155
    %1846 = vmatpush.msra.mxu0 %v148
    %1847 = vmatpush.msra.mxu0 %v141
    %1848 = vmatpush.msra.mxu0 %v134
    %1849 = vmatpush.msra.mxu0 %v127
    %1850 = vmatmul.f32.gmra.mxu0 %v114
    %v1851 = vpop.f32.mrf.mxu0
    %v1852 = vadd.f32 %v1025, %v1851
    %1853 = vdwg.mxu0
    %1854 = vmatpush.msra.mxu0 %v344
    %1855 = vmatpush.msra.mxu0 %v337
    %1856 = vmatpush.msra.mxu0 %v330
    %1857 = vmatpush.msra.mxu0 %v323
    %1858 = vmatpush.msra.mxu0 %v316
    %1859 = vmatpush.msra.mxu0 %v309
    %1860 = vmatpush.msra.mxu0 %v302
    %1861 = vmatpush.msra.mxu0 %v295
    %1862 = vmatpush.msra.mxu0 %v288
    %1863 = vmatpush.msra.mxu0 %v281
    %1864 = vmatpush.msra.mxu0 %v274
    %1865 = vmatpush.msra.mxu0 %v267
    %1866 = vmatpush.msra.mxu0 %v260
    %1867 = vmatpush.msra.mxu0 %v253
    %1868 = vmatpush.msra.mxu0 %v246
    %1869 = vmatpush.msra.mxu0 %v239
    %1870 = vmatmul.f32.gmra.mxu0 %v115
    %v1871 = vpop.f32.mrf.mxu0
    %v1872 = vadd.f32 %v1852, %v1871
    %1873 = vdwg.mxu0
    %1874 = vmatpush.msra.mxu0 %v456
    %1875 = vmatpush.msra.mxu0 %v449
    %1876 = vmatpush.msra.mxu0 %v442
    %1877 = vmatpush.msra.mxu0 %v435
    %1878 = vmatpush.msra.mxu0 %v428
    %1879 = vmatpush.msra.mxu0 %v421
    %1880 = vmatpush.msra.mxu0 %v414
    %1881 = vmatpush.msra.mxu0 %v407
    %1882 = vmatpush.msra.mxu0 %v400
    %1883 = vmatpush.msra.mxu0 %v393
    %1884 = vmatpush.msra.mxu0 %v386
    %1885 = vmatpush.msra.mxu0 %v379
    %1886 = vmatpush.msra.mxu0 %v372
    %1887 = vmatpush.msra.mxu0 %v365
    %1888 = vmatpush.msra.mxu0 %v358
    %1889 = vmatpush.msra.mxu0 %v351
    %1890 = vmatmul.f32.gmra.mxu0 %v116
    %v1891 = vpop.f32.mrf.mxu0
    %v1892 = vadd.f32 %v1872, %v1891
    %1893 = vdwg.mxu0
    %1894 = vmatpush.msra.mxu0 %v568
    %1895 = vmatpush.msra.mxu0 %v561
    %1896 = vmatpush.msra.mxu0 %v554
    %1897 = vmatpush.msra.mxu0 %v547
    %1898 = vmatpush.msra.mxu0 %v540
    %1899 = vmatpush.msra.mxu0 %v533
    %1900 = vmatpush.msra.mxu0 %v526
    %1901 = vmatpush.msra.mxu0 %v519
    %1902 = vmatpush.msra.mxu0 %v512
    %1903 = vmatpush.msra.mxu0 %v505
    %1904 = vmatpush.msra.mxu0 %v498
    %1905 = vmatpush.msra.mxu0 %v491
    %1906 = vmatpush.msra.mxu0 %v484
    %1907 = vmatpush.msra.mxu0 %v477
    %1908 = vmatpush.msra.mxu0 %v470
    %1909 = vmatpush.msra.mxu0 %v463
    %1910 = vmatmul.f32.gmra.mxu0 %v117
    %v1911 = vpop.f32.mrf.mxu0
    %v1912 = vadd.f32 %v1892, %v1911
    %1913 = vdwg.mxu0
    %1914 = vmatpush.msra.mxu0 %v680
    %1915 = vmatpush.msra.mxu0 %v673
    %1916 = vmatpush.msra.mxu0 %v666
    %1917 = vmatpush.msra.mxu0 %v659
    %1918 = vmatpush.msra.mxu0 %v652
    %1919 = vmatpush.msra.mxu0 %v645
    %1920 = vmatpush.msra.mxu0 %v638
    %1921 = vmatpush.msra.mxu0 %v631
    %1922 = vmatpush.msra.mxu0 %v624
    %1923 = vmatpush.msra.mxu0 %v617
    %1924 = vmatpush.msra.mxu0 %v610
    %1925 = vmatpush.msra.mxu0 %v603
    %1926 = vmatpush.msra.mxu0 %v596
    %1927 = vmatpush.msra.mxu0 %v589
    %1928 = vmatpush.msra.mxu0 %v582
    %1929 = vmatpush.msra.mxu0 %v575
    %1930 = vmatmul.f32.gmra.mxu0 %v118
    %v1931 = vpop.f32.mrf.mxu0
    %v1932 = vadd.f32 %v1912, %v1931
    %1933 = vdwg.mxu0
    %1934 = vmatpush.msra.mxu0 %v792
    %1935 = vmatpush.msra.mxu0 %v785
    %1936 = vmatpush.msra.mxu0 %v778
    %1937 = vmatpush.msra.mxu0 %v771
    %1938 = vmatpush.msra.mxu0 %v764
    %1939 = vmatpush.msra.mxu0 %v757
    %1940 = vmatpush.msra.mxu0 %v750
    %1941 = vmatpush.msra.mxu0 %v743
    %1942 = vmatpush.msra.mxu0 %v736
    %1943 = vmatpush.msra.mxu0 %v729
    %1944 = vmatpush.msra.mxu0 %v722
    %1945 = vmatpush.msra.mxu0 %v715
    %1946 = vmatpush.msra.mxu0 %v708
    %1947 = vmatpush.msra.mxu0 %v701
    %1948 = vmatpush.msra.mxu0 %v694
    %1949 = vmatpush.msra.mxu0 %v687
    %1950 = vmatmul.f32.gmra.mxu0 %v119
    %v1951 = vpop.f32.mrf.mxu0
    %v1952 = vadd.f32 %v1932, %v1951
    %1953 = vdwg.mxu0
    %1954 = vmatpush.msra.mxu0 %v904
    %1955 = vmatpush.msra.mxu0 %v897
    %1956 = vmatpush.msra.mxu0 %v890
    %1957 = vmatpush.msra.mxu0 %v883
    %1958 = vmatpush.msra.mxu0 %v876
    %1959 = vmatpush.msra.mxu0 %v869
    %1960 = vmatpush.msra.mxu0 %v862
    %1961 = vmatpush.msra.mxu0 %v855
    %1962 = vmatpush.msra.mxu0 %v848
    %1963 = vmatpush.msra.mxu0 %v841
    %1964 = vmatpush.msra.mxu0 %v834
    %1965 = vmatpush.msra.mxu0 %v827
    %1966 = vmatpush.msra.mxu0 %v820
    %1967 = vmatpush.msra.mxu0 %v813
    %1968 = vmatpush.msra.mxu0 %v806
    %1969 = vmatpush.msra.mxu0 %v799
    %1970 = vmatmul.f32.gmra.mxu0 %v120
    %v1971 = vpop.f32.mrf.mxu0
    %v1972 = vadd.f32 %v1952, %v1971
    %1973 = vdwg.mxu0
    %1974 = vmatpush.msra.mxu0 %v1016
    %1975 = vmatpush.msra.mxu0 %v1009
    %1976 = vmatpush.msra.mxu0 %v1002
    %1977 = vmatpush.msra.mxu0 %v995
    %1978 = vmatpush.msra.mxu0 %v988
    %1979 = vmatpush.msra.mxu0 %v981
    %1980 = vmatpush.msra.mxu0 %v974
    %1981 = vmatpush.msra.mxu0 %v967
    %1982 = vmatpush.msra.mxu0 %v960
    %1983 = vmatpush.msra.mxu0 %v953
    %1984 = vmatpush.msra.mxu0 %v946
    %1985 = vmatpush.msra.mxu0 %v939
    %1986 = vmatpush.msra.mxu0 %v932
    %1987 = vmatpush.msra.mxu0 %v925
    %1988 = vmatpush.msra.mxu0 %v918
    %1989 = vmatpush.msra.mxu0 %v911
    %1990 = vmatmul.f32.gmra.mxu0 %v121
    %v1991 = vpop.f32.mrf.mxu0
    %v1992 = vadd.f32 %v1972, %v1991
    %1993 = vdwg.mxu0
    %1994 = vmatpush.msra.mxu0 %v233
    %1995 = vmatpush.msra.mxu0 %v226
    %1996 = vmatpush.msra.mxu0 %v219
    %1997 = vmatpush.msra.mxu0 %v212
    %1998 = vmatpush.msra.mxu0 %v205
    %1999 = vmatpush.msra.mxu0 %v198
    %2000 = vmatpush.msra.mxu0 %v191
    %2001 = vmatpush.msra.mxu0 %v184
    %2002 = vmatpush.msra.mxu0 %v177
    %2003 = vmatpush.msra.mxu0 %v170
    %2004 = vmatpush.msra.mxu0 %v163
    %2005 = vmatpush.msra.mxu0 %v156
    %2006 = vmatpush.msra.mxu0 %v149
    %2007 = vmatpush.msra.mxu0 %v142
    %2008 = vmatpush.msra.mxu0 %v135
    %2009 = vmatpush.msra.mxu0 %v128
    %2010 = vmatmul.f32.gmra.mxu0 %v114
    %v2011 = vpop.f32.mrf.mxu0
    %v2012 = vadd.f32 %v1026, %v2011
    %2013 = vdwg.mxu0
    %2014 = vmatpush.msra.mxu0 %v345
    %2015 = vmatpush.msra.mxu0 %v338
    %2016 = vmatpush.msra.mxu0 %v331
    %2017 = vmatpush.msra.mxu0 %v324
    %2018 = vmatpush.msra.mxu0 %v317
    %2019 = vmatpush.msra.mxu0 %v310
    %2020 = vmatpush.msra.mxu0 %v303
    %2021 = vmatpush.msra.mxu0 %v296
    %2022 = vmatpush.msra.mxu0 %v289
    %2023 = vmatpush.msra.mxu0 %v282
    %2024 = vmatpush.msra.mxu0 %v275
    %2025 = vmatpush.msra.mxu0 %v268
    %2026 = vmatpush.msra.mxu0 %v261
    %2027 = vmatpush.msra.mxu0 %v254
    %2028 = vmatpush.msra.mxu0 %v247
    %2029 = vmatpush.msra.mxu0 %v240
    %2030 = vmatmul.f32.gmra.mxu0 %v115
    %v2031 = vpop.f32.mrf.mxu0
    %v2032 = vadd.f32 %v2012, %v2031
    %2033 = vdwg.mxu0
    %2034 = vmatpush.msra.mxu0 %v457
    %2035 = vmatpush.msra.mxu0 %v450
    %2036 = vmatpush.msra.mxu0 %v443
    %2037 = vmatpush.msra.mxu0 %v436
    %2038 = vmatpush.msra.mxu0 %v429
    %2039 = vmatpush.msra.mxu0 %v422
    %2040 = vmatpush.msra.mxu0 %v415
    %2041 = vmatpush.msra.mxu0 %v408
    %2042 = vmatpush.msra.mxu0 %v401
    %2043 = vmatpush.msra.mxu0 %v394
    %2044 = vmatpush.msra.mxu0 %v387
    %2045 = vmatpush.msra.mxu0 %v380
    %2046 = vmatpush.msra.mxu0 %v373
    %2047 = vmatpush.msra.mxu0 %v366
    %2048 = vmatpush.msra.mxu0 %v359
    %2049 = vmatpush.msra.mxu0 %v352
    %2050 = vmatmul.f32.gmra.mxu0 %v116
    %v2051 = vpop.f32.mrf.mxu0
    %v2052 = vadd.f32 %v2032, %v2051
    %2053 = vdwg.mxu0
    %2054 = vmatpush.msra.mxu0 %v569
    %2055 = vmatpush.msra.mxu0 %v562
    %2056 = vmatpush.msra.mxu0 %v555
    %2057 = vmatpush.msra.mxu0 %v548
    %2058 = vmatpush.msra.mxu0 %v541
    %2059 = vmatpush.msra.mxu0 %v534
    %2060 = vmatpush.msra.mxu0 %v527
    %2061 = vmatpush.msra.mxu0 %v520
    %2062 = vmatpush.msra.mxu0 %v513
    %2063 = vmatpush.msra.mxu0 %v506
    %2064 = vmatpush.msra.mxu0 %v499
    %2065 = vmatpush.msra.mxu0 %v492
    %2066 = vmatpush.msra.mxu0 %v485
    %2067 = vmatpush.msra.mxu0 %v478
    %2068 = vmatpush.msra.mxu0 %v471
    %2069 = vmatpush.msra.mxu0 %v464
    %2070 = vmatmul.f32.gmra.mxu0 %v117
    %v2071 = vpop.f32.mrf.mxu0
    %v2072 = vadd.f32 %v2052, %v2071
    %2073 = vdwg.mxu0
    %2074 = vmatpush.msra.mxu0 %v681
    %2075 = vmatpush.msra.mxu0 %v674
    %2076 = vmatpush.msra.mxu0 %v667
    %2077 = vmatpush.msra.mxu0 %v660
    %2078 = vmatpush.msra.mxu0 %v653
    %2079 = vmatpush.msra.mxu0 %v646
    %2080 = vmatpush.msra.mxu0 %v639
    %2081 = vmatpush.msra.mxu0 %v632
    %2082 = vmatpush.msra.mxu0 %v625
    %2083 = vmatpush.msra.mxu0 %v618
    %2084 = vmatpush.msra.mxu0 %v611
    %2085 = vmatpush.msra.mxu0 %v604
    %2086 = vmatpush.msra.mxu0 %v597
    %2087 = vmatpush.msra.mxu0 %v590
    %2088 = vmatpush.msra.mxu0 %v583
    %2089 = vmatpush.msra.mxu0 %v576
    %2090 = vmatmul.f32.gmra.mxu0 %v118
    %v2091 = vpop.f32.mrf.mxu0
    %v2092 = vadd.f32 %v2072, %v2091
    %2093 = vdwg.mxu0
    %2094 = vmatpush.msra.mxu0 %v793
    %2095 = vmatpush.msra.mxu0 %v786
    %2096 = vmatpush.msra.mxu0 %v779
    %2097 = vmatpush.msra.mxu0 %v772
    %2098 = vmatpush.msra.mxu0 %v765
    %2099 = vmatpush.msra.mxu0 %v758
    %2100 = vmatpush.msra.mxu0 %v751
    %2101 = vmatpush.msra.mxu0 %v744
    %2102 = vmatpush.msra.mxu0 %v737
    %2103 = vmatpush.msra.mxu0 %v730
    %2104 = vmatpush.msra.mxu0 %v723
    %2105 = vmatpush.msra.mxu0 %v716
    %2106 = vmatpush.msra.mxu0 %v709
    %2107 = vmatpush.msra.mxu0 %v702
    %2108 = vmatpush.msra.mxu0 %v695
    %2109 = vmatpush.msra.mxu0 %v688
    %2110 = vmatmul.f32.gmra.mxu0 %v119
    %v2111 = vpop.f32.mrf.mxu0
    %v2112 = vadd.f32 %v2092, %v2111
    %2113 = vdwg.mxu0
    %2114 = vmatpush.msra.mxu0 %v905
    %2115 = vmatpush.msra.mxu0 %v898
    %2116 = vmatpush.msra.mxu0 %v891
    %2117 = vmatpush.msra.mxu0 %v884
    %2118 = vmatpush.msra.mxu0 %v877
    %2119 = vmatpush.msra.mxu0 %v870
    %2120 = vmatpush.msra.mxu0 %v863
    %2121 = vmatpush.msra.mxu0 %v856
    %2122 = vmatpush.msra.mxu0 %v849
    %2123 = vmatpush.msra.mxu0 %v842
    %2124 = vmatpush.msra.mxu0 %v835
    %2125 = vmatpush.msra.mxu0 %v828
    %2126 = vmatpush.msra.mxu0 %v821
    %2127 = vmatpush.msra.mxu0 %v814
    %2128 = vmatpush.msra.mxu0 %v807
    %2129 = vmatpush.msra.mxu0 %v800
    %2130 = vmatmul.f32.gmra.mxu0 %v120
    %v2131 = vpop.f32.mrf.mxu0
    %v2132 = vadd.f32 %v2112, %v2131
    %2133 = vdwg.mxu0
    %2134 = vmatpush.msra.mxu0 %v1017
    %2135 = vmatpush.msra.mxu0 %v1010
    %2136 = vmatpush.msra.mxu0 %v1003
    %2137 = vmatpush.msra.mxu0 %v996
    %2138 = vmatpush.msra.mxu0 %v989
    %2139 = vmatpush.msra.mxu0 %v982
    %2140 = vmatpush.msra.mxu0 %v975
    %2141 = vmatpush.msra.mxu0 %v968
    %2142 = vmatpush.msra.mxu0 %v961
    %2143 = vmatpush.msra.mxu0 %v954
    %2144 = vmatpush.msra.mxu0 %v947
    %2145 = vmatpush.msra.mxu0 %v940
    %2146 = vmatpush.msra.mxu0 %v933
    %2147 = vmatpush.msra.mxu0 %v926
    %2148 = vmatpush.msra.mxu0 %v919
    %2149 = vmatpush.msra.mxu0 %v912
    %2150 = vmatmul.f32.gmra.mxu0 %v121
    %v2151 = vpop.f32.mrf.mxu0
    %v2152 = vadd.f32 %v2132, %v2151
    %2153 = vdwg.mxu0
    %v2154 = vmax.f32 %v1192, 0.0
    %v2155 = vmax.f32 %v1352, 0.0
    %v2156 = vmax.f32 %v1512, 0.0
    %v2157 = vmax.f32 %v1672, 0.0
    %v2158 = vmax.f32 %v1832, 0.0
    %v2159 = vmax.f32 %v1992, 0.0
    %v2160 = vmax.f32 %v2152, 0.0
    %v2161 = vld [vmem:[#allocation6] sm:$0xff]
    %v2162 = vld [vmem:[#allocation6 + $0x8] sm:$0xff]
    %v2163 = vld [vmem:[#allocation6 + $0x10] sm:$0xff]
    %v2164 = vld [vmem:[#allocation6 + $0x18] sm:$0xff]
    %v2165 = vld [vmem:[#allocation6 + $0x20] sm:$0xff]
    %v2166 = vld [vmem:[#allocation6 + $0x28] sm:$0xff]
    %v2167 = vld [vmem:[#allocation6 + $0x30] sm:$0xff]
    %v2168 = vld [vmem:[#allocation6 + $0x38] sm:$0xff]
    %v2169 = vld [vmem:[#allocation6 + $0x40] sm:$0xff]
    %v2170 = vld [vmem:[#allocation6 + $0x48] sm:$0xff]
    %v2171 = vld [vmem:[#allocation6 + $0x50] sm:$0xff]
    %v2172 = vld [vmem:[#allocation6 + $0x58] sm:$0xff]
    %v2173 = vld [vmem:[#allocation6 + $0x60] sm:$0xff]
    %v2174 = vld [vmem:[#allocation6 + $0x68] sm:$0xff]
    %v2175 = vld [vmem:[#allocation6 + $0x70] sm:$0xff]
    %v2176 = vld [vmem:[#allocation6 + $0x78] sm:$0xff]
    %v2177 = vld [vmem:[#allocation6 + $0x80] sm:$0xff]
    %v2178 = vld [vmem:[#allocation6 + $0x88] sm:$0xff]
    %v2179 = vld [vmem:[#allocation6 + $0x90] sm:$0xff]
    %v2180 = vld [vmem:[#allocation6 + $0x98] sm:$0xff]
    %v2181 = vld [vmem:[#allocation6 + $0xa0] sm:$0xff]
    %v2182 = vld [vmem:[#allocation6 + $0xa8] sm:$0xff]
    %v2183 = vld [vmem:[#allocation6 + $0xb0] sm:$0xff]
    %v2184 = vld [vmem:[#allocation6 + $0xb8] sm:$0xff]
    %v2185 = vld [vmem:[#allocation6 + $0xc0] sm:$0xff]
    %v2186 = vld [vmem:[#allocation6 + $0xc8] sm:$0xff]
    %v2187 = vld [vmem:[#allocation6 + $0xd0] sm:$0xff]
    %v2188 = vld [vmem:[#allocation6 + $0xd8] sm:$0xff]
    %v2189 = vld [vmem:[#allocation6 + $0xe0] sm:$0xff]
    %v2190 = vld [vmem:[#allocation6 + $0xe8] sm:$0xff]
    %v2191 = vld [vmem:[#allocation6 + $0xf0] sm:$0xff]
    %v2192 = vld [vmem:[#allocation6 + $0xf8] sm:$0xff]
    %v2193 = vld [vmem:[#allocation6 + $0x100] sm:$0xff]
    %v2194 = vld [vmem:[#allocation6 + $0x108] sm:$0xff]
    %v2195 = vld [vmem:[#allocation6 + $0x110] sm:$0xff]
    %v2196 = vld [vmem:[#allocation6 + $0x118] sm:$0xff]
    %v2197 = vld [vmem:[#allocation6 + $0x120] sm:$0xff]
    %v2198 = vld [vmem:[#allocation6 + $0x128] sm:$0xff]
    %v2199 = vld [vmem:[#allocation6 + $0x130] sm:$0xff]
    %v2200 = vld [vmem:[#allocation6 + $0x138] sm:$0xff]
    %v2201 = vld [vmem:[#allocation6 + $0x140] sm:$0xff]
    %v2202 = vld [vmem:[#allocation6 + $0x148] sm:$0xff]
    %v2203 = vld [vmem:[#allocation6 + $0x150] sm:$0xff]
    %v2204 = vld [vmem:[#allocation6 + $0x158] sm:$0xff]
    %v2205 = vld [vmem:[#allocation6 + $0x160] sm:$0xff]
    %v2206 = vld [vmem:[#allocation6 + $0x168] sm:$0xff]
    %v2207 = vld [vmem:[#allocation6 + $0x170] sm:$0xff]
    %v2208 = vld [vmem:[#allocation6 + $0x178] sm:$0xff]
    %v2209 = vld [vmem:[#allocation6 + $0x180] sm:$0xff]
    %v2210 = vld [vmem:[#allocation6 + $0x188] sm:$0xff]
    %v2211 = vld [vmem:[#allocation6 + $0x190] sm:$0xff]
    %v2212 = vld [vmem:[#allocation6 + $0x198] sm:$0xff]
    %v2213 = vld [vmem:[#allocation6 + $0x1a0] sm:$0xff]
    %v2214 = vld [vmem:[#allocation6 + $0x1a8] sm:$0xff]
    %v2215 = vld [vmem:[#allocation6 + $0x1b0] sm:$0xff]
    %v2216 = vld [vmem:[#allocation6 + $0x1b8] sm:$0xff]
    %v2217 = vld [vmem:[#allocation6 + $0x1c0] sm:$0xff]
    %v2218 = vld [vmem:[#allocation6 + $0x1c8] sm:$0xff]
    %v2219 = vld [vmem:[#allocation6 + $0x1d0] sm:$0xff]
    %v2220 = vld [vmem:[#allocation6 + $0x1d8] sm:$0xff]
    %v2221 = vld [vmem:[#allocation6 + $0x1e0] sm:$0xff]
    %v2222 = vld [vmem:[#allocation6 + $0x1e8] sm:$0xff]
    %v2223 = vld [vmem:[#allocation6 + $0x1f0] sm:$0xff]
    %v2224 = vld [vmem:[#allocation6 + $0x1f8] sm:$0xff]
    %v2225 = vld [vmem:[#allocation6 + $0x200] sm:$0xff]
    %v2226 = vld [vmem:[#allocation6 + $0x208] sm:$0xff]
    %v2227 = vld [vmem:[#allocation6 + $0x210] sm:$0xff]
    %v2228 = vld [vmem:[#allocation6 + $0x218] sm:$0xff]
    %v2229 = vld [vmem:[#allocation6 + $0x220] sm:$0xff]
    %v2230 = vld [vmem:[#allocation6 + $0x228] sm:$0xff]
    %v2231 = vld [vmem:[#allocation6 + $0x230] sm:$0xff]
    %v2232 = vld [vmem:[#allocation6 + $0x238] sm:$0xff]
    %v2233 = vld [vmem:[#allocation6 + $0x240] sm:$0xff]
    %v2234 = vld [vmem:[#allocation6 + $0x248] sm:$0xff]
    %v2235 = vld [vmem:[#allocation6 + $0x250] sm:$0xff]
    %v2236 = vld [vmem:[#allocation6 + $0x258] sm:$0xff]
    %v2237 = vld [vmem:[#allocation6 + $0x260] sm:$0xff]
    %v2238 = vld [vmem:[#allocation6 + $0x268] sm:$0xff]
    %v2239 = vld [vmem:[#allocation6 + $0x270] sm:$0xff]
    %v2240 = vld [vmem:[#allocation6 + $0x278] sm:$0xff]
    %v2241 = vld [vmem:[#allocation6 + $0x280] sm:$0xff]
    %v2242 = vld [vmem:[#allocation6 + $0x288] sm:$0xff]
    %v2243 = vld [vmem:[#allocation6 + $0x290] sm:$0xff]
    %v2244 = vld [vmem:[#allocation6 + $0x298] sm:$0xff]
    %v2245 = vld [vmem:[#allocation6 + $0x2a0] sm:$0xff]
    %v2246 = vld [vmem:[#allocation6 + $0x2a8] sm:$0xff]
    %v2247 = vld [vmem:[#allocation6 + $0x2b0] sm:$0xff]
    %v2248 = vld [vmem:[#allocation6 + $0x2b8] sm:$0xff]
    %v2249 = vld [vmem:[#allocation6 + $0x2c0] sm:$0xff]
    %v2250 = vld [vmem:[#allocation6 + $0x2c8] sm:$0xff]
    %v2251 = vld [vmem:[#allocation6 + $0x2d0] sm:$0xff]
    %v2252 = vld [vmem:[#allocation6 + $0x2d8] sm:$0xff]
    %v2253 = vld [vmem:[#allocation6 + $0x2e0] sm:$0xff]
    %v2254 = vld [vmem:[#allocation6 + $0x2e8] sm:$0xff]
    %v2255 = vld [vmem:[#allocation6 + $0x2f0] sm:$0xff]
    %v2256 = vld [vmem:[#allocation6 + $0x2f8] sm:$0xff]
    %v2257 = vld [vmem:[#allocation6 + $0x300] sm:$0xff]
    %v2258 = vld [vmem:[#allocation6 + $0x308] sm:$0xff]
    %v2259 = vld [vmem:[#allocation7] sm:$0x1]
    %v2261 = vperm.slane %v2259, 0
    %vm2263 = vcmask 130048
    %v2265 = vsel %vm2263, %v2160, 0
    %2267 = vmatpush.msra.mxu0 %v2176
    %2268 = vmatpush.msra.mxu0 %v2175
    %2269 = vmatpush.msra.mxu0 %v2174
    %2270 = vmatpush.msra.mxu0 %v2173
    %2271 = vmatpush.msra.mxu0 %v2172
    %2272 = vmatpush.msra.mxu0 %v2171
    %2273 = vmatpush.msra.mxu0 %v2170
    %2274 = vmatpush.msra.mxu0 %v2169
    %2275 = vmatpush.msra.mxu0 %v2168
    %2276 = vmatpush.msra.mxu0 %v2167
    %2277 = vmatpush.msra.mxu0 %v2166
    %2278 = vmatpush.msra.mxu0 %v2165
    %2279 = vmatpush.msra.mxu0 %v2164
    %2280 = vmatpush.msra.mxu0 %v2163
    %2281 = vmatpush.msra.mxu0 %v2162
    %2282 = vmatpush.msra.mxu0 %v2161
    %2283 = vmatmul.f32.gmra.mxu0 %v2154
    %v2284 = vpop.f32.mrf.mxu0
    %v2285 = vadd.f32 %v2261, %v2284
    %2286 = vdwg.mxu0
    %2287 = vmatpush.msra.mxu0 %v2192
    %2288 = vmatpush.msra.mxu0 %v2191
    %2289 = vmatpush.msra.mxu0 %v2190
    %2290 = vmatpush.msra.mxu0 %v2189
    %2291 = vmatpush.msra.mxu0 %v2188
    %2292 = vmatpush.msra.mxu0 %v2187
    %2293 = vmatpush.msra.mxu0 %v2186
    %2294 = vmatpush.msra.mxu0 %v2185
    %2295 = vmatpush.msra.mxu0 %v2184
    %2296 = vmatpush.msra.mxu0 %v2183
    %2297 = vmatpush.msra.mxu0 %v2182
    %2298 = vmatpush.msra.mxu0 %v2181
    %2299 = vmatpush.msra.mxu0 %v2180
    %2300 = vmatpush.msra.mxu0 %v2179
    %2301 = vmatpush.msra.mxu0 %v2178
    %2302 = vmatpush.msra.mxu0 %v2177
    %2303 = vmatmul.f32.gmra.mxu0 %v2155
    %v2304 = vpop.f32.mrf.mxu0
    %v2305 = vadd.f32 %v2285, %v2304
    %2306 = vdwg.mxu0
    %2307 = vmatpush.msra.mxu0 %v2208
    %2308 = vmatpush.msra.mxu0 %v2207
    %2309 = vmatpush.msra.mxu0 %v2206
    %2310 = vmatpush.msra.mxu0 %v2205
    %2311 = vmatpush.msra.mxu0 %v2204
    %2312 = vmatpush.msra.mxu0 %v2203
    %2313 = vmatpush.msra.mxu0 %v2202
    %2314 = vmatpush.msra.mxu0 %v2201
    %2315 = vmatpush.msra.mxu0 %v2200
    %2316 = vmatpush.msra.mxu0 %v2199
    %2317 = vmatpush.msra.mxu0 %v2198
    %2318 = vmatpush.msra.mxu0 %v2197
    %2319 = vmatpush.msra.mxu0 %v2196
    %2320 = vmatpush.msra.mxu0 %v2195
    %2321 = vmatpush.msra.mxu0 %v2194
    %2322 = vmatpush.msra.mxu0 %v2193
    %2323 = vmatmul.f32.gmra.mxu0 %v2156
    %v2324 = vpop.f32.mrf.mxu0
    %v2325 = vadd.f32 %v2305, %v2324
    %2326 = vdwg.mxu0
    %2327 = vmatpush.msra.mxu0 %v2224
    %2328 = vmatpush.msra.mxu0 %v2223
    %2329 = vmatpush.msra.mxu0 %v2222
    %2330 = vmatpush.msra.mxu0 %v2221
    %2331 = vmatpush.msra.mxu0 %v2220
    %2332 = vmatpush.msra.mxu0 %v2219
    %2333 = vmatpush.msra.mxu0 %v2218
    %2334 = vmatpush.msra.mxu0 %v2217
    %2335 = vmatpush.msra.mxu0 %v2216
    %2336 = vmatpush.msra.mxu0 %v2215
    %2337 = vmatpush.msra.mxu0 %v2214
    %2338 = vmatpush.msra.mxu0 %v2213
    %2339 = vmatpush.msra.mxu0 %v2212
    %2340 = vmatpush.msra.mxu0 %v2211
    %2341 = vmatpush.msra.mxu0 %v2210
    %2342 = vmatpush.msra.mxu0 %v2209
    %2343 = vmatmul.f32.gmra.mxu0 %v2157
    %v2344 = vpop.f32.mrf.mxu0
    %v2345 = vadd.f32 %v2325, %v2344
    %2346 = vdwg.mxu0
    %2347 = vmatpush.msra.mxu0 %v2240
    %2348 = vmatpush.msra.mxu0 %v2239
    %2349 = vmatpush.msra.mxu0 %v2238
    %2350 = vmatpush.msra.mxu0 %v2237
    %2351 = vmatpush.msra.mxu0 %v2236
    %2352 = vmatpush.msra.mxu0 %v2235
    %2353 = vmatpush.msra.mxu0 %v2234
    %2354 = vmatpush.msra.mxu0 %v2233
    %2355 = vmatpush.msra.mxu0 %v2232
    %2356 = vmatpush.msra.mxu0 %v2231
    %2357 = vmatpush.msra.mxu0 %v2230
    %2358 = vmatpush.msra.mxu0 %v2229
    %2359 = vmatpush.msra.mxu0 %v2228
    %2360 = vmatpush.msra.mxu0 %v2227
    %2361 = vmatpush.msra.mxu0 %v2226
    %2362 = vmatpush.msra.mxu0 %v2225
    %2363 = vmatmul.f32.gmra.mxu0 %v2158
    %v2364 = vpop.f32.mrf.mxu0
    %v2365 = vadd.f32 %v2345, %v2364
    %2366 = vdwg.mxu0
    %2367 = vmatpush.msra.mxu0 %v2256
    %2368 = vmatpush.msra.mxu0 %v2255
    %2369 = vmatpush.msra.mxu0 %v2254
    %2370 = vmatpush.msra.mxu0 %v2253
    %2371 = vmatpush.msra.mxu0 %v2252
    %2372 = vmatpush.msra.mxu0 %v2251
    %2373 = vmatpush.msra.mxu0 %v2250
    %2374 = vmatpush.msra.mxu0 %v2249
    %2375 = vmatpush.msra.mxu0 %v2248
    %2376 = vmatpush.msra.mxu0 %v2247
    %2377 = vmatpush.msra.mxu0 %v2246
    %2378 = vmatpush.msra.mxu0 %v2245
    %2379 = vmatpush.msra.mxu0 %v2244
    %2380 = vmatpush.msra.mxu0 %v2243
    %2381 = vmatpush.msra.mxu0 %v2242
    %2382 = vmatpush.msra.mxu0 %v2241
    %2383 = vmatmul.f32.gmra.mxu0 %v2159
    %v2384 = vpop.f32.mrf.mxu0
    %v2385 = vadd.f32 %v2365, %v2384
    %2386 = vdwg.mxu0
    %2387 = vmatpush.msra.mxu0 0.0
    %2388 = vmatpush.msra.mxu0 0.0
    %2389 = vmatpush.msra.mxu0 0.0
    %2390 = vmatpush.msra.mxu0 0.0
    %2391 = vmatpush.msra.mxu0 0.0
    %2392 = vmatpush.msra.mxu0 0.0
    %2393 = vmatpush.msra.mxu0 0.0
    %2394 = vmatpush.msra.mxu0 0.0
    %2395 = vmatpush.msra.mxu0 0.0
    %2396 = vmatpush.msra.mxu0 0.0
    %2397 = vmatpush.msra.mxu0 0.0
    %2398 = vmatpush.msra.mxu0 0.0
    %2399 = vmatpush.msra.mxu0 0.0
    %2400 = vmatpush.msra.mxu0 0.0
    %2401 = vmatpush.msra.mxu0 %v2258
    %2402 = vmatpush.msra.mxu0 %v2257
    %2403 = vmatmul.f32.gmra.mxu0 %v2265
    %v2404 = vpop.f32.mrf.mxu0
    %v2405 = vadd.f32 %v2385, %v2404
    %2406 = vdwg.mxu0
    %v2407 = vmax.f32 %v2405, 0.0
    %v2408 = vld [vmem:[#allocation9] sm:$0xff]
    %v2409 = vld [vmem:[#allocation9 + $0x8] sm:$0xff]
    %v2410 = vld [vmem:[#allocation9 + $0x10] sm:$0xff]
    %v2411 = vld [vmem:[#allocation9 + $0x18] sm:$0xff]
    %v2412 = vld [vmem:[#allocation9 + $0x20] sm:$0xff]
    %v2413 = vld [vmem:[#allocation9 + $0x28] sm:$0xff]
    %v2414 = vld [vmem:[#allocation9 + $0x30] sm:$0xff]
    %v2415 = vld [vmem:[#allocation9 + $0x38] sm:$0xff]
    %v2416 = vld [vmem:[#allocation9 + $0x40] sm:$0xff]
    %v2417 = vld [vmem:[#allocation9 + $0x48] sm:$0xff]
    %v2418 = vld [vmem:[#allocation9 + $0x50] sm:$0xff]
    %v2419 = vld [vmem:[#allocation9 + $0x58] sm:$0xff]
    %v2420 = vld [vmem:[#allocation9 + $0x60] sm:$0xff]
    %v2421 = vld [vmem:[#allocation9 + $0x68] sm:$0xff]
    %v2422 = vld [vmem:[#allocation9 + $0x70] sm:$0xff]
    %v2423 = vld [vmem:[#allocation9 + $0x78] sm:$0xff]
    %v2424 = vld [vmem:[#allocation10] sm:$0x1]
    %v2426 = vperm.slane %v2424, 0
    %2428 = vmatpush.msra.mxu0 %v2423
    %2429 = vmatpush.msra.mxu0 %v2422
    %2430 = vmatpush.msra.mxu0 %v2421
    %2431 = vmatpush.msra.mxu0 %v2420
    %2432 = vmatpush.msra.mxu0 %v2419
    %2433 = vmatpush.msra.mxu0 %v2418
    %2434 = vmatpush.msra.mxu0 %v2417
    %2435 = vmatpush.msra.mxu0 %v2416
    %2436 = vmatpush.msra.mxu0 %v2415
    %2437 = vmatpush.msra.mxu0 %v2414
    %2438 = vmatpush.msra.mxu0 %v2413
    %2439 = vmatpush.msra.mxu0 %v2412
    %2440 = vmatpush.msra.mxu0 %v2411
    %2441 = vmatpush.msra.mxu0 %v2410
    %2442 = vmatpush.msra.mxu0 %v2409
    %2443 = vmatpush.msra.mxu0 %v2408
    %2444 = vmatmul.f32.gmra.mxu0 %v2407
    %v2445 = vpop.f32.mrf.mxu0
    %v2446 = vadd.f32 %v2426, %v2445
    %2447 = vdwg.mxu0
    %2448 = vst [vmem:[%s7] sm:$0xff] %v2446
    // Predicated region
    $region54: #{_lambda_.1} parent=1 // pred_check
      _
    $region55: #{_lambda_.1} parent=1 // pred_check_branch
      %2450 = sbr.rel (0) target = $region57
    $region56: #{_lambda_.1} parent=1 // pred_region
      _
    $region57: #{_lambda_.1} parent=1 // pred_fallthru
      _
    // Predicated region
    $region58: #{_lambda_.1} parent=1 // pred_check
      _
    $region59: #{_lambda_.1} parent=1 // pred_check_branch
      %2452 = sbr.rel (0) target = $region61
    $region60: #{_lambda_.1} parent=1 // pred_region
      _
    $region61: #{_lambda_.1} parent=1 // pred_fallthru
      _
    %2453 = vsyncpa [#allocation3], 1
    %2454 = vsyncpa [#allocation5], 1
    %2455 = vsyncpa [#allocation8], 1
    %2456 = vsyncpa [#allocation11], 1

</llo_original>
